<compile_context>
chip_gen: v7x
topology: tpu7x:2x2x1
jax: 0.10.0
libtpu: 0.0.40
codegen_flags: <defaults>
</compile_context>

<pallas_src>
import jax
import jax.numpy as jnp
from jax.experimental import pallas as pl
from jax.experimental.pallas import tpu as pltpu

K = 7      # conv kernel size
PAD = 3    # 'same' padding for stride 1
LANE = 128


def _round_up(x, m):
    return ((x + m - 1) // m) * m


def _conv_relu_kernel(w_ref, x_ref, o_ref):
    # w_ref : (K*K,) f32 conv weight in SMEM (scalar taps).
    # x_ref : (Hp, Lin) f32 zero-padded, lane-packed input slab in VMEM.
    #         Image n's padded frame occupies columns [n*Wp, n*Wp + Wp);
    #         trailing lanes beyond N*Wp are zeros.
    # o_ref : (H, Lout) f32 output slab (Lout = round_up(N*Wp, 128)); image n's
    #         valid output occupies columns [n*Wp, n*Wp + W).
    H, Lout = o_ref.shape

    # 49-tap stencil: ref-level slices per tap, 4 independent accumulators.
    n_acc = 4
    accs = [jnp.zeros((H, Lout), dtype=jnp.float32) for _ in range(n_acc)]
    t = 0
    for dh in range(K):
        for dw in range(K):
            tap = w_ref[dh * K + dw] * x_ref[dh:dh + H, dw:dw + Lout]
            accs[t % n_acc] = accs[t % n_acc] + tap
            t += 1
    acc = (accs[0] + accs[1]) + (accs[2] + accs[3])

    # Fused ReLU + single unmasked, lane-dense store.
    o_ref[...] = jnp.maximum(acc, 0.0).astype(o_ref.dtype)


@jax.jit
def simple_cnn_forward(x_nchw, weight):
    """x_nchw: (N, 1, H, W) float32; weight: (1, 1, 7, 7) float32 -> NCHW out."""
    N, C, H, W = x_nchw.shape
    assert C == 1
    Hp, Wp = H + 2 * PAD, W + 2 * PAD
    L = N * Wp                          # valid output slab width
    Lout = _round_up(L, LANE)           # lane-dense output width
    Lin = _round_up(Lout + K - 1, LANE)  # input slab width (covers all shifts)

    # ---- wrapper-side layout plumbing (pure XLA ops, overlaps pallas_call) ---
    x = x_nchw[:, 0, :, :].astype(jnp.float32)                  # (N, H, W)
    xp = jnp.pad(x, ((0, 0), (PAD, PAD), (PAD, PAD)))           # (N, Hp, Wp)
    x_slab = jnp.transpose(xp, (1, 0, 2)).reshape(Hp, L)        # (Hp, N*Wp)
    x_slab = jnp.pad(x_slab, ((0, 0), (0, Lin - L)))            # (Hp, Lin)

    w_flat = weight.reshape(K * K).astype(jnp.float32)          # (49,) -> SMEM

    out_slab = pl.pallas_call(
        _conv_relu_kernel,
        out_shape=jax.ShapeDtypeStruct((H, Lout), jnp.float32),
        grid_spec=pltpu.PrefetchScalarGridSpec(
            num_scalar_prefetch=0,
            grid=(1,),                  # whole (tiny) problem in a single step
            in_specs=[
                pl.BlockSpec(memory_space=pltpu.MemorySpace.SMEM),  # weights
                pl.BlockSpec((Hp, Lin), lambda i: (0, 0)),          # input slab
            ],
            out_specs=pl.BlockSpec((H, Lout), lambda i: (0, 0)),
        ),
        compiler_params=pltpu.CompilerParams(
            dimension_semantics=("arbitrary",)),
    )(w_flat, x_slab)

    # (H, Lout) slab -> (N, 1, H, W) NCHW (drop junk lanes, un-pack batch).
    out = out_slab[:, :L].reshape(H, N, Wp)[:, :, :W]   # (H, N, W)
    out = jnp.transpose(out, (1, 0, 2))                 # (N, H, W)
    return out[:, None, :, :].astype(x_nchw.dtype)


def reference_forward(x_nchw, weight):
    """Pure-JAX reference (conv + relu) for correctness checking."""
    out = jax.lax.conv_general_dilated(
        x_nchw, weight,
        window_strides=(1, 1),
        padding=((PAD, PAD), (PAD, PAD)),
        dimension_numbers=("NCHW", "OIHW", "NCHW"),
    )
    return jnp.maximum(out, 0.0)


if __name__ == "__main__":
    key = jax.random.PRNGKey(0)
    k_x, k_w = jax.random.split(key)

    # Small shapes consistent with the module: batch=2, 1 channel, 16x16 spatial.
    x = jax.random.normal(k_x, (2, 1, 16, 16), dtype=jnp.float32)

    # Deterministic weight init (kaiming-uniform-like bound, as nn.Conv2d would).
    fan_in = 1 * K * K
    bound = 1.0 / (fan_in ** 0.5)
    weight = jax.random.uniform(k_w, (1, 1, K, K), dtype=jnp.float32,
                                minval=-bound, maxval=bound)

    y = simple_cnn_forward(x, weight)
    y = jax.block_until_ready(y)

    y_ref = reference_forward(x, weight)
    assert y.shape == (2, 1, 16, 16)
    assert jnp.allclose(y, y_ref, atol=1e-5, rtol=1e-5)

    print("KERNEL_OK")
</pallas_src>

<mosaic_0001>
module attributes {stable_mosaic.version = 11 : i64} {
  func.func @_conv_relu_kernel(%arg0: i32, %arg1: memref<49xf32, #tpu.memory_space<smem>>, %arg2: memref<22x256xf32, #tpu.memory_space<vmem>>, %arg3: memref<16x128xf32, #tpu.memory_space<vmem>>) attributes {dimension_semantics = [#tpu.dimension_semantics<arbitrary>], iteration_bounds = array<i64: 1>, scalar_prefetch = 0 : i64, scratch_operands = 0 : i64, tpu.core_type = #tpu.core_type<tc>, window_params = [{transform_indices = @transform_0, window_bounds = array<i64: 49>}, {pipeline_mode = #tpu.pipeline_mode<synchronous>, transform_indices = @transform_1, window_bounds = array<i64: 22, 256>}, {pipeline_mode = #tpu.pipeline_mode<synchronous>, transform_indices = @transform_2, window_bounds = array<i64: 16, 128>}]} {
    %cst = arith.constant 0.000000e+00 : f32
    %0 = vector.broadcast %cst : f32 to vector<16x128xf32>
    %cst_0 = arith.constant 0.000000e+00 : f32
    %1 = vector.broadcast %cst_0 : f32 to vector<16x128xf32>
    %cst_1 = arith.constant 0.000000e+00 : f32
    %2 = vector.broadcast %cst_1 : f32 to vector<16x128xf32>
    %cst_2 = arith.constant 0.000000e+00 : f32
    %3 = vector.broadcast %cst_2 : f32 to vector<16x128xf32>
    %c0 = arith.constant 0 : index
    %4 = memref.load %arg1[%c0] : memref<49xf32, #tpu.memory_space<smem>>
    %c0_3 = arith.constant 0 : index
    %c0_4 = arith.constant 0 : index
    %5 = vector.load %arg2[%c0_3, %c0_4] : memref<22x256xf32, #tpu.memory_space<vmem>>, vector<16x128xf32>
    %6 = vector.broadcast %4 : f32 to vector<16x128xf32>
    %7 = arith.mulf %6, %5 : vector<16x128xf32>
    %8 = arith.addf %0, %7 : vector<16x128xf32>
    %c1 = arith.constant 1 : index
    %9 = memref.load %arg1[%c1] : memref<49xf32, #tpu.memory_space<smem>>
    %c0_5 = arith.constant 0 : index
    %c1_6 = arith.constant 1 : index
    %10 = vector.load %arg2[%c0_5, %c1_6] : memref<22x256xf32, #tpu.memory_space<vmem>>, vector<16x128xf32>
    %11 = vector.broadcast %9 : f32 to vector<16x128xf32>
    %12 = arith.mulf %11, %10 : vector<16x128xf32>
    %13 = arith.addf %1, %12 : vector<16x128xf32>
    %c2 = arith.constant 2 : index
    %14 = memref.load %arg1[%c2] : memref<49xf32, #tpu.memory_space<smem>>
    %c0_7 = arith.constant 0 : index
    %c2_8 = arith.constant 2 : index
    %15 = vector.load %arg2[%c0_7, %c2_8] : memref<22x256xf32, #tpu.memory_space<vmem>>, vector<16x128xf32>
    %16 = vector.broadcast %14 : f32 to vector<16x128xf32>
    %17 = arith.mulf %16, %15 : vector<16x128xf32>
    %18 = arith.addf %2, %17 : vector<16x128xf32>
    %c3 = arith.constant 3 : index
    %19 = memref.load %arg1[%c3] : memref<49xf32, #tpu.memory_space<smem>>
    %c0_9 = arith.constant 0 : index
    %c3_10 = arith.constant 3 : index
    %20 = vector.load %arg2[%c0_9, %c3_10] : memref<22x256xf32, #tpu.memory_space<vmem>>, vector<16x128xf32>
    %21 = vector.broadcast %19 : f32 to vector<16x128xf32>
    %22 = arith.mulf %21, %20 : vector<16x128xf32>
    %23 = arith.addf %3, %22 : vector<16x128xf32>
    %c4 = arith.constant 4 : index
    %24 = memref.load %arg1[%c4] : memref<49xf32, #tpu.memory_space<smem>>
    %c0_11 = arith.constant 0 : index
    %c4_12 = arith.constant 4 : index
    %25 = vector.load %arg2[%c0_11, %c4_12] : memref<22x256xf32, #tpu.memory_space<vmem>>, vector<16x128xf32>
    %26 = vector.broadcast %24 : f32 to vector<16x128xf32>
    %27 = arith.mulf %26, %25 : vector<16x128xf32>
    %28 = arith.addf %8, %27 : vector<16x128xf32>
    %c5 = arith.constant 5 : index
    %29 = memref.load %arg1[%c5] : memref<49xf32, #tpu.memory_space<smem>>
    %c0_13 = arith.constant 0 : index
    %c5_14 = arith.constant 5 : index
    %30 = vector.load %arg2[%c0_13, %c5_14] : memref<22x256xf32, #tpu.memory_space<vmem>>, vector<16x128xf32>
    %31 = vector.broadcast %29 : f32 to vector<16x128xf32>
    %32 = arith.mulf %31, %30 : vector<16x128xf32>
    %33 = arith.addf %13, %32 : vector<16x128xf32>
    %c6 = arith.constant 6 : index
    %34 = memref.load %arg1[%c6] : memref<49xf32, #tpu.memory_space<smem>>
    %c0_15 = arith.constant 0 : index
    %c6_16 = arith.constant 6 : index
    %35 = vector.load %arg2[%c0_15, %c6_16] : memref<22x256xf32, #tpu.memory_space<vmem>>, vector<16x128xf32>
    %36 = vector.broadcast %34 : f32 to vector<16x128xf32>
    %37 = arith.mulf %36, %35 : vector<16x128xf32>
    %38 = arith.addf %18, %37 : vector<16x128xf32>
    %c7 = arith.constant 7 : index
    %39 = memref.load %arg1[%c7] : memref<49xf32, #tpu.memory_space<smem>>
    %c1_17 = arith.constant 1 : index
    %c0_18 = arith.constant 0 : index
    %40 = vector.load %arg2[%c1_17, %c0_18] : memref<22x256xf32, #tpu.memory_space<vmem>>, vector<16x128xf32>
    %41 = vector.broadcast %39 : f32 to vector<16x128xf32>
    %42 = arith.mulf %41, %40 : vector<16x128xf32>
    %43 = arith.addf %23, %42 : vector<16x128xf32>
    %c8 = arith.constant 8 : index
    %44 = memref.load %arg1[%c8] : memref<49xf32, #tpu.memory_space<smem>>
    %c1_19 = arith.constant 1 : index
    %c1_20 = arith.constant 1 : index
    %45 = vector.load %arg2[%c1_19, %c1_20] : memref<22x256xf32, #tpu.memory_space<vmem>>, vector<16x128xf32>
    %46 = vector.broadcast %44 : f32 to vector<16x128xf32>
    %47 = arith.mulf %46, %45 : vector<16x128xf32>
    %48 = arith.addf %28, %47 : vector<16x128xf32>
    %c9 = arith.constant 9 : index
    %49 = memref.load %arg1[%c9] : memref<49xf32, #tpu.memory_space<smem>>
    %c1_21 = arith.constant 1 : index
    %c2_22 = arith.constant 2 : index
    %50 = vector.load %arg2[%c1_21, %c2_22] : memref<22x256xf32, #tpu.memory_space<vmem>>, vector<16x128xf32>
    %51 = vector.broadcast %49 : f32 to vector<16x128xf32>
    %52 = arith.mulf %51, %50 : vector<16x128xf32>
    %53 = arith.addf %33, %52 : vector<16x128xf32>
    %c10 = arith.constant 10 : index
    %54 = memref.load %arg1[%c10] : memref<49xf32, #tpu.memory_space<smem>>
    %c1_23 = arith.constant 1 : index
    %c3_24 = arith.constant 3 : index
    %55 = vector.load %arg2[%c1_23, %c3_24] : memref<22x256xf32, #tpu.memory_space<vmem>>, vector<16x128xf32>
    %56 = vector.broadcast %54 : f32 to vector<16x128xf32>
    %57 = arith.mulf %56, %55 : vector<16x128xf32>
    %58 = arith.addf %38, %57 : vector<16x128xf32>
    %c11 = arith.constant 11 : index
    %59 = memref.load %arg1[%c11] : memref<49xf32, #tpu.memory_space<smem>>
    %c1_25 = arith.constant 1 : index
    %c4_26 = arith.constant 4 : index
    %60 = vector.load %arg2[%c1_25, %c4_26] : memref<22x256xf32, #tpu.memory_space<vmem>>, vector<16x128xf32>
    %61 = vector.broadcast %59 : f32 to vector<16x128xf32>
    %62 = arith.mulf %61, %60 : vector<16x128xf32>
    %63 = arith.addf %43, %62 : vector<16x128xf32>
    %c12 = arith.constant 12 : index
    %64 = memref.load %arg1[%c12] : memref<49xf32, #tpu.memory_space<smem>>
    %c1_27 = arith.constant 1 : index
    %c5_28 = arith.constant 5 : index
    %65 = vector.load %arg2[%c1_27, %c5_28] : memref<22x256xf32, #tpu.memory_space<vmem>>, vector<16x128xf32>
    %66 = vector.broadcast %64 : f32 to vector<16x128xf32>
    %67 = arith.mulf %66, %65 : vector<16x128xf32>
    %68 = arith.addf %48, %67 : vector<16x128xf32>
    %c13 = arith.constant 13 : index
    %69 = memref.load %arg1[%c13] : memref<49xf32, #tpu.memory_space<smem>>
    %c1_29 = arith.constant 1 : index
    %c6_30 = arith.constant 6 : index
    %70 = vector.load %arg2[%c1_29, %c6_30] : memref<22x256xf32, #tpu.memory_space<vmem>>, vector<16x128xf32>
    %71 = vector.broadcast %69 : f32 to vector<16x128xf32>
    %72 = arith.mulf %71, %70 : vector<16x128xf32>
    %73 = arith.addf %53, %72 : vector<16x128xf32>
    %c14 = arith.constant 14 : index
    %74 = memref.load %arg1[%c14] : memref<49xf32, #tpu.memory_space<smem>>
    %c2_31 = arith.constant 2 : index
    %c0_32 = arith.constant 0 : index
    %75 = vector.load %arg2[%c2_31, %c0_32] : memref<22x256xf32, #tpu.memory_space<vmem>>, vector<16x128xf32>
    %76 = vector.broadcast %74 : f32 to vector<16x128xf32>
    %77 = arith.mulf %76, %75 : vector<16x128xf32>
    %78 = arith.addf %58, %77 : vector<16x128xf32>
    %c15 = arith.constant 15 : index
    %79 = memref.load %arg1[%c15] : memref<49xf32, #tpu.memory_space<smem>>
    %c2_33 = arith.constant 2 : index
    %c1_34 = arith.constant 1 : index
    %80 = vector.load %arg2[%c2_33, %c1_34] : memref<22x256xf32, #tpu.memory_space<vmem>>, vector<16x128xf32>
    %81 = vector.broadcast %79 : f32 to vector<16x128xf32>
    %82 = arith.mulf %81, %80 : vector<16x128xf32>
    %83 = arith.addf %63, %82 : vector<16x128xf32>
    %c16 = arith.constant 16 : index
    %84 = memref.load %arg1[%c16] : memref<49xf32, #tpu.memory_space<smem>>
    %c2_35 = arith.constant 2 : index
    %c2_36 = arith.constant 2 : index
    %85 = vector.load %arg2[%c2_35, %c2_36] : memref<22x256xf32, #tpu.memory_space<vmem>>, vector<16x128xf32>
    %86 = vector.broadcast %84 : f32 to vector<16x128xf32>
    %87 = arith.mulf %86, %85 : vector<16x128xf32>
    %88 = arith.addf %68, %87 : vector<16x128xf32>
    %c17 = arith.constant 17 : index
    %89 = memref.load %arg1[%c17] : memref<49xf32, #tpu.memory_space<smem>>
    %c2_37 = arith.constant 2 : index
    %c3_38 = arith.constant 3 : index
    %90 = vector.load %arg2[%c2_37, %c3_38] : memref<22x256xf32, #tpu.memory_space<vmem>>, vector<16x128xf32>
    %91 = vector.broadcast %89 : f32 to vector<16x128xf32>
    %92 = arith.mulf %91, %90 : vector<16x128xf32>
    %93 = arith.addf %73, %92 : vector<16x128xf32>
    %c18 = arith.constant 18 : index
    %94 = memref.load %arg1[%c18] : memref<49xf32, #tpu.memory_space<smem>>
    %c2_39 = arith.constant 2 : index
    %c4_40 = arith.constant 4 : index
    %95 = vector.load %arg2[%c2_39, %c4_40] : memref<22x256xf32, #tpu.memory_space<vmem>>, vector<16x128xf32>
    %96 = vector.broadcast %94 : f32 to vector<16x128xf32>
    %97 = arith.mulf %96, %95 : vector<16x128xf32>
    %98 = arith.addf %78, %97 : vector<16x128xf32>
    %c19 = arith.constant 19 : index
    %99 = memref.load %arg1[%c19] : memref<49xf32, #tpu.memory_space<smem>>
    %c2_41 = arith.constant 2 : index
    %c5_42 = arith.constant 5 : index
    %100 = vector.load %arg2[%c2_41, %c5_42] : memref<22x256xf32, #tpu.memory_space<vmem>>, vector<16x128xf32>
    %101 = vector.broadcast %99 : f32 to vector<16x128xf32>
    %102 = arith.mulf %101, %100 : vector<16x128xf32>
    %103 = arith.addf %83, %102 : vector<16x128xf32>
    %c20 = arith.constant 20 : index
    %104 = memref.load %arg1[%c20] : memref<49xf32, #tpu.memory_space<smem>>
    %c2_43 = arith.constant 2 : index
    %c6_44 = arith.constant 6 : index
    %105 = vector.load %arg2[%c2_43, %c6_44] : memref<22x256xf32, #tpu.memory_space<vmem>>, vector<16x128xf32>
    %106 = vector.broadcast %104 : f32 to vector<16x128xf32>
    %107 = arith.mulf %106, %105 : vector<16x128xf32>
    %108 = arith.addf %88, %107 : vector<16x128xf32>
    %c21 = arith.constant 21 : index
    %109 = memref.load %arg1[%c21] : memref<49xf32, #tpu.memory_space<smem>>
    %c3_45 = arith.constant 3 : index
    %c0_46 = arith.constant 0 : index
    %110 = vector.load %arg2[%c3_45, %c0_46] : memref<22x256xf32, #tpu.memory_space<vmem>>, vector<16x128xf32>
    %111 = vector.broadcast %109 : f32 to vector<16x128xf32>
    %112 = arith.mulf %111, %110 : vector<16x128xf32>
    %113 = arith.addf %93, %112 : vector<16x128xf32>
    %c22 = arith.constant 22 : index
    %114 = memref.load %arg1[%c22] : memref<49xf32, #tpu.memory_space<smem>>
    %c3_47 = arith.constant 3 : index
    %c1_48 = arith.constant 1 : index
    %115 = vector.load %arg2[%c3_47, %c1_48] : memref<22x256xf32, #tpu.memory_space<vmem>>, vector<16x128xf32>
    %116 = vector.broadcast %114 : f32 to vector<16x128xf32>
    %117 = arith.mulf %116, %115 : vector<16x128xf32>
    %118 = arith.addf %98, %117 : vector<16x128xf32>
    %c23 = arith.constant 23 : index
    %119 = memref.load %arg1[%c23] : memref<49xf32, #tpu.memory_space<smem>>
    %c3_49 = arith.constant 3 : index
    %c2_50 = arith.constant 2 : index
    %120 = vector.load %arg2[%c3_49, %c2_50] : memref<22x256xf32, #tpu.memory_space<vmem>>, vector<16x128xf32>
    %121 = vector.broadcast %119 : f32 to vector<16x128xf32>
    %122 = arith.mulf %121, %120 : vector<16x128xf32>
    %123 = arith.addf %103, %122 : vector<16x128xf32>
    %c24 = arith.constant 24 : index
    %124 = memref.load %arg1[%c24] : memref<49xf32, #tpu.memory_space<smem>>
    %c3_51 = arith.constant 3 : index
    %c3_52 = arith.constant 3 : index
    %125 = vector.load %arg2[%c3_51, %c3_52] : memref<22x256xf32, #tpu.memory_space<vmem>>, vector<16x128xf32>
    %126 = vector.broadcast %124 : f32 to vector<16x128xf32>
    %127 = arith.mulf %126, %125 : vector<16x128xf32>
    %128 = arith.addf %108, %127 : vector<16x128xf32>
    %c25 = arith.constant 25 : index
    %129 = memref.load %arg1[%c25] : memref<49xf32, #tpu.memory_space<smem>>
    %c3_53 = arith.constant 3 : index
    %c4_54 = arith.constant 4 : index
    %130 = vector.load %arg2[%c3_53, %c4_54] : memref<22x256xf32, #tpu.memory_space<vmem>>, vector<16x128xf32>
    %131 = vector.broadcast %129 : f32 to vector<16x128xf32>
    %132 = arith.mulf %131, %130 : vector<16x128xf32>
    %133 = arith.addf %113, %132 : vector<16x128xf32>
    %c26 = arith.constant 26 : index
    %134 = memref.load %arg1[%c26] : memref<49xf32, #tpu.memory_space<smem>>
    %c3_55 = arith.constant 3 : index
    %c5_56 = arith.constant 5 : index
    %135 = vector.load %arg2[%c3_55, %c5_56] : memref<22x256xf32, #tpu.memory_space<vmem>>, vector<16x128xf32>
    %136 = vector.broadcast %134 : f32 to vector<16x128xf32>
    %137 = arith.mulf %136, %135 : vector<16x128xf32>
    %138 = arith.addf %118, %137 : vector<16x128xf32>
    %c27 = arith.constant 27 : index
    %139 = memref.load %arg1[%c27] : memref<49xf32, #tpu.memory_space<smem>>
    %c3_57 = arith.constant 3 : index
    %c6_58 = arith.constant 6 : index
    %140 = vector.load %arg2[%c3_57, %c6_58] : memref<22x256xf32, #tpu.memory_space<vmem>>, vector<16x128xf32>
    %141 = vector.broadcast %139 : f32 to vector<16x128xf32>
    %142 = arith.mulf %141, %140 : vector<16x128xf32>
    %143 = arith.addf %123, %142 : vector<16x128xf32>
    %c28 = arith.constant 28 : index
    %144 = memref.load %arg1[%c28] : memref<49xf32, #tpu.memory_space<smem>>
    %c4_59 = arith.constant 4 : index
    %c0_60 = arith.constant 0 : index
    %145 = vector.load %arg2[%c4_59, %c0_60] : memref<22x256xf32, #tpu.memory_space<vmem>>, vector<16x128xf32>
    %146 = vector.broadcast %144 : f32 to vector<16x128xf32>
    %147 = arith.mulf %146, %145 : vector<16x128xf32>
    %148 = arith.addf %128, %147 : vector<16x128xf32>
    %c29 = arith.constant 29 : index
    %149 = memref.load %arg1[%c29] : memref<49xf32, #tpu.memory_space<smem>>
    %c4_61 = arith.constant 4 : index
    %c1_62 = arith.constant 1 : index
    %150 = vector.load %arg2[%c4_61, %c1_62] : memref<22x256xf32, #tpu.memory_space<vmem>>, vector<16x128xf32>
    %151 = vector.broadcast %149 : f32 to vector<16x128xf32>
    %152 = arith.mulf %151, %150 : vector<16x128xf32>
    %153 = arith.addf %133, %152 : vector<16x128xf32>
    %c30 = arith.constant 30 : index
    %154 = memref.load %arg1[%c30] : memref<49xf32, #tpu.memory_space<smem>>
    %c4_63 = arith.constant 4 : index
    %c2_64 = arith.constant 2 : index
    %155 = vector.load %arg2[%c4_63, %c2_64] : memref<22x256xf32, #tpu.memory_space<vmem>>, vector<16x128xf32>
    %156 = vector.broadcast %154 : f32 to vector<16x128xf32>
    %157 = arith.mulf %156, %155 : vector<16x128xf32>
    %158 = arith.addf %138, %157 : vector<16x128xf32>
    %c31 = arith.constant 31 : index
    %159 = memref.load %arg1[%c31] : memref<49xf32, #tpu.memory_space<smem>>
    %c4_65 = arith.constant 4 : index
    %c3_66 = arith.constant 3 : index
    %160 = vector.load %arg2[%c4_65, %c3_66] : memref<22x256xf32, #tpu.memory_space<vmem>>, vector<16x128xf32>
    %161 = vector.broadcast %159 : f32 to vector<16x128xf32>
    %162 = arith.mulf %161, %160 : vector<16x128xf32>
    %163 = arith.addf %143, %162 : vector<16x128xf32>
    %c32 = arith.constant 32 : index
    %164 = memref.load %arg1[%c32] : memref<49xf32, #tpu.memory_space<smem>>
    %c4_67 = arith.constant 4 : index
    %c4_68 = arith.constant 4 : index
    %165 = vector.load %arg2[%c4_67, %c4_68] : memref<22x256xf32, #tpu.memory_space<vmem>>, vector<16x128xf32>
    %166 = vector.broadcast %164 : f32 to vector<16x128xf32>
    %167 = arith.mulf %166, %165 : vector<16x128xf32>
    %168 = arith.addf %148, %167 : vector<16x128xf32>
    %c33 = arith.constant 33 : index
    %169 = memref.load %arg1[%c33] : memref<49xf32, #tpu.memory_space<smem>>
    %c4_69 = arith.constant 4 : index
    %c5_70 = arith.constant 5 : index
    %170 = vector.load %arg2[%c4_69, %c5_70] : memref<22x256xf32, #tpu.memory_space<vmem>>, vector<16x128xf32>
    %171 = vector.broadcast %169 : f32 to vector<16x128xf32>
    %172 = arith.mulf %171, %170 : vector<16x128xf32>
    %173 = arith.addf %153, %172 : vector<16x128xf32>
    %c34 = arith.constant 34 : index
    %174 = memref.load %arg1[%c34] : memref<49xf32, #tpu.memory_space<smem>>
    %c4_71 = arith.constant 4 : index
    %c6_72 = arith.constant 6 : index
    %175 = vector.load %arg2[%c4_71, %c6_72] : memref<22x256xf32, #tpu.memory_space<vmem>>, vector<16x128xf32>
    %176 = vector.broadcast %174 : f32 to vector<16x128xf32>
    %177 = arith.mulf %176, %175 : vector<16x128xf32>
    %178 = arith.addf %158, %177 : vector<16x128xf32>
    %c35 = arith.constant 35 : index
    %179 = memref.load %arg1[%c35] : memref<49xf32, #tpu.memory_space<smem>>
    %c5_73 = arith.constant 5 : index
    %c0_74 = arith.constant 0 : index
    %180 = vector.load %arg2[%c5_73, %c0_74] : memref<22x256xf32, #tpu.memory_space<vmem>>, vector<16x128xf32>
    %181 = vector.broadcast %179 : f32 to vector<16x128xf32>
    %182 = arith.mulf %181, %180 : vector<16x128xf32>
    %183 = arith.addf %163, %182 : vector<16x128xf32>
    %c36 = arith.constant 36 : index
    %184 = memref.load %arg1[%c36] : memref<49xf32, #tpu.memory_space<smem>>
    %c5_75 = arith.constant 5 : index
    %c1_76 = arith.constant 1 : index
    %185 = vector.load %arg2[%c5_75, %c1_76] : memref<22x256xf32, #tpu.memory_space<vmem>>, vector<16x128xf32>
    %186 = vector.broadcast %184 : f32 to vector<16x128xf32>
    %187 = arith.mulf %186, %185 : vector<16x128xf32>
    %188 = arith.addf %168, %187 : vector<16x128xf32>
    %c37 = arith.constant 37 : index
    %189 = memref.load %arg1[%c37] : memref<49xf32, #tpu.memory_space<smem>>
    %c5_77 = arith.constant 5 : index
    %c2_78 = arith.constant 2 : index
    %190 = vector.load %arg2[%c5_77, %c2_78] : memref<22x256xf32, #tpu.memory_space<vmem>>, vector<16x128xf32>
    %191 = vector.broadcast %189 : f32 to vector<16x128xf32>
    %192 = arith.mulf %191, %190 : vector<16x128xf32>
    %193 = arith.addf %173, %192 : vector<16x128xf32>
    %c38 = arith.constant 38 : index
    %194 = memref.load %arg1[%c38] : memref<49xf32, #tpu.memory_space<smem>>
    %c5_79 = arith.constant 5 : index
    %c3_80 = arith.constant 3 : index
    %195 = vector.load %arg2[%c5_79, %c3_80] : memref<22x256xf32, #tpu.memory_space<vmem>>, vector<16x128xf32>
    %196 = vector.broadcast %194 : f32 to vector<16x128xf32>
    %197 = arith.mulf %196, %195 : vector<16x128xf32>
    %198 = arith.addf %178, %197 : vector<16x128xf32>
    %c39 = arith.constant 39 : index
    %199 = memref.load %arg1[%c39] : memref<49xf32, #tpu.memory_space<smem>>
    %c5_81 = arith.constant 5 : index
    %c4_82 = arith.constant 4 : index
    %200 = vector.load %arg2[%c5_81, %c4_82] : memref<22x256xf32, #tpu.memory_space<vmem>>, vector<16x128xf32>
    %201 = vector.broadcast %199 : f32 to vector<16x128xf32>
    %202 = arith.mulf %201, %200 : vector<16x128xf32>
    %203 = arith.addf %183, %202 : vector<16x128xf32>
    %c40 = arith.constant 40 : index
    %204 = memref.load %arg1[%c40] : memref<49xf32, #tpu.memory_space<smem>>
    %c5_83 = arith.constant 5 : index
    %c5_84 = arith.constant 5 : index
    %205 = vector.load %arg2[%c5_83, %c5_84] : memref<22x256xf32, #tpu.memory_space<vmem>>, vector<16x128xf32>
    %206 = vector.broadcast %204 : f32 to vector<16x128xf32>
    %207 = arith.mulf %206, %205 : vector<16x128xf32>
    %208 = arith.addf %188, %207 : vector<16x128xf32>
    %c41 = arith.constant 41 : index
    %209 = memref.load %arg1[%c41] : memref<49xf32, #tpu.memory_space<smem>>
    %c5_85 = arith.constant 5 : index
    %c6_86 = arith.constant 6 : index
    %210 = vector.load %arg2[%c5_85, %c6_86] : memref<22x256xf32, #tpu.memory_space<vmem>>, vector<16x128xf32>
    %211 = vector.broadcast %209 : f32 to vector<16x128xf32>
    %212 = arith.mulf %211, %210 : vector<16x128xf32>
    %213 = arith.addf %193, %212 : vector<16x128xf32>
    %c42 = arith.constant 42 : index
    %214 = memref.load %arg1[%c42] : memref<49xf32, #tpu.memory_space<smem>>
    %c6_87 = arith.constant 6 : index
    %c0_88 = arith.constant 0 : index
    %215 = vector.load %arg2[%c6_87, %c0_88] : memref<22x256xf32, #tpu.memory_space<vmem>>, vector<16x128xf32>
    %216 = vector.broadcast %214 : f32 to vector<16x128xf32>
    %217 = arith.mulf %216, %215 : vector<16x128xf32>
    %218 = arith.addf %198, %217 : vector<16x128xf32>
    %c43 = arith.constant 43 : index
    %219 = memref.load %arg1[%c43] : memref<49xf32, #tpu.memory_space<smem>>
    %c6_89 = arith.constant 6 : index
    %c1_90 = arith.constant 1 : index
    %220 = vector.load %arg2[%c6_89, %c1_90] : memref<22x256xf32, #tpu.memory_space<vmem>>, vector<16x128xf32>
    %221 = vector.broadcast %219 : f32 to vector<16x128xf32>
    %222 = arith.mulf %221, %220 : vector<16x128xf32>
    %223 = arith.addf %203, %222 : vector<16x128xf32>
    %c44 = arith.constant 44 : index
    %224 = memref.load %arg1[%c44] : memref<49xf32, #tpu.memory_space<smem>>
    %c6_91 = arith.constant 6 : index
    %c2_92 = arith.constant 2 : index
    %225 = vector.load %arg2[%c6_91, %c2_92] : memref<22x256xf32, #tpu.memory_space<vmem>>, vector<16x128xf32>
    %226 = vector.broadcast %224 : f32 to vector<16x128xf32>
    %227 = arith.mulf %226, %225 : vector<16x128xf32>
    %228 = arith.addf %208, %227 : vector<16x128xf32>
    %c45 = arith.constant 45 : index
    %229 = memref.load %arg1[%c45] : memref<49xf32, #tpu.memory_space<smem>>
    %c6_93 = arith.constant 6 : index
    %c3_94 = arith.constant 3 : index
    %230 = vector.load %arg2[%c6_93, %c3_94] : memref<22x256xf32, #tpu.memory_space<vmem>>, vector<16x128xf32>
    %231 = vector.broadcast %229 : f32 to vector<16x128xf32>
    %232 = arith.mulf %231, %230 : vector<16x128xf32>
    %233 = arith.addf %213, %232 : vector<16x128xf32>
    %c46 = arith.constant 46 : index
    %234 = memref.load %arg1[%c46] : memref<49xf32, #tpu.memory_space<smem>>
    %c6_95 = arith.constant 6 : index
    %c4_96 = arith.constant 4 : index
    %235 = vector.load %arg2[%c6_95, %c4_96] : memref<22x256xf32, #tpu.memory_space<vmem>>, vector<16x128xf32>
    %236 = vector.broadcast %234 : f32 to vector<16x128xf32>
    %237 = arith.mulf %236, %235 : vector<16x128xf32>
    %238 = arith.addf %218, %237 : vector<16x128xf32>
    %c47 = arith.constant 47 : index
    %239 = memref.load %arg1[%c47] : memref<49xf32, #tpu.memory_space<smem>>
    %c6_97 = arith.constant 6 : index
    %c5_98 = arith.constant 5 : index
    %240 = vector.load %arg2[%c6_97, %c5_98] : memref<22x256xf32, #tpu.memory_space<vmem>>, vector<16x128xf32>
    %241 = vector.broadcast %239 : f32 to vector<16x128xf32>
    %242 = arith.mulf %241, %240 : vector<16x128xf32>
    %243 = arith.addf %223, %242 : vector<16x128xf32>
    %c48 = arith.constant 48 : index
    %244 = memref.load %arg1[%c48] : memref<49xf32, #tpu.memory_space<smem>>
    %c6_99 = arith.constant 6 : index
    %c6_100 = arith.constant 6 : index
    %245 = vector.load %arg2[%c6_99, %c6_100] : memref<22x256xf32, #tpu.memory_space<vmem>>, vector<16x128xf32>
    %246 = vector.broadcast %244 : f32 to vector<16x128xf32>
    %247 = arith.mulf %246, %245 : vector<16x128xf32>
    %248 = arith.addf %228, %247 : vector<16x128xf32>
    %249 = arith.addf %248, %233 : vector<16x128xf32>
    %250 = arith.addf %238, %243 : vector<16x128xf32>
    %251 = arith.addf %249, %250 : vector<16x128xf32>
    %cst_101 = arith.constant 0.000000e+00 : f32
    %252 = vector.broadcast %cst_101 : f32 to vector<16x128xf32>
    %253 = arith.maximumf %251, %252 : vector<16x128xf32>
    %c0_102 = arith.constant 0 : index
    %c0_103 = arith.constant 0 : index
    %254 = vector.load %arg3[%c0_102, %c0_103] : memref<16x128xf32, #tpu.memory_space<vmem>>, vector<16x128xf32>
    tpu.vector_store %arg3[%c0_102, %c0_103], %253 {strides = array<i32>} : memref<16x128xf32, #tpu.memory_space<vmem>>, vector<16x128xf32>,
    return
  }
  func.func @transform_0(%arg0: i32) -> i32 {
    %c0_i32 = arith.constant 0 : i32
    %c0_i32_0 = arith.constant 0 : i32
    return %c0_i32 : i32
  }
  func.func @transform_1(%arg0: i32) -> (i32, i32) {
    %c0_i32 = arith.constant 0 : i32
    %c0_i32_0 = arith.constant 0 : i32
    %c0_i32_1 = arith.constant 0 : i32
    return %c0_i32, %c0_i32_0 : i32, i32
  }
  func.func @transform_2(%arg0: i32) -> (i32, i32) {
    %c0_i32 = arith.constant 0 : i32
    %c0_i32_0 = arith.constant 0 : i32
    %c0_i32_1 = arith.constant 0 : i32
    return %c0_i32, %c0_i32_0 : i32, i32
  }
}

</mosaic_0001>

<llo_original>
// kernel: simple_cnn_forward.1
$region0: #{simple_cnn_forward.1}
  #allocation0 [shape = 'u32[]', space=smem, size = 0x4, offset = 0x4, fixed_abs, tag = 'smem constant byte address 0x4 - core index']
  #allocation1 [shape = 'u32[144,128]{1,0:T(1,128)}', space=vmem, size = 0x12000, scoped, tag = 'internal scratch']
  %s0 = inlined_call_operand.vmem [shape: f32[49], index: 0, kind: input, shape index: {}]
  %s1 = inlined_call_operand.vmem [shape: f32[22,256], index: 1, kind: input, shape index: {}]
  %s2 = inlined_call_operand.vmem [shape: f32[16,128], index: 2, kind: output, shape index: {}]
  %s3 = sld [smem:[#allocation0]]
  $region22: #{simple_cnn_forward.1} parent=0
    _
  %s5 = ssub.s32 1, %s3
  %s6 = scalar_select 0, %s5, %s3
  $region1: #{simple_cnn_forward.1} parent=0
    #allocation2 [shape = 'u8[512]{0}', space=smem, size = 0x200, scoped, tag = 'input window, operand 0, single buffered']
    #allocation3 [shape = 's32[1]{0}', space=sflag, size = 0x4, scoped, tag = 'scoped memory for simple_cnn_forward.1']
    %7 = vsyncpa [#allocation3], 0
    // Predicated region
    $region2: #{simple_cnn_forward.1} parent=1 // pred_check
      _
    $region3: #{simple_cnn_forward.1} parent=1 // pred_check_branch
      %9 = sbr.rel (0) target = $region5
    $region4: #{simple_cnn_forward.1} parent=1 // pred_region
      %s11 = ssub.s32 16, 16
      %12 = vsyncadd [#allocation3], %s11
      %s14 = sshll.u32 %s0, 4
      %s15 = int_to_ptr.vmem [resolvable:$true] %s14
      %17 = dma.vmem_to_smem %s15, 16, [#allocation2], [#allocation3]
    $region5: #{simple_cnn_forward.1} parent=1 // pred_fallthru
      _
    // Predicated region
    $region6: #{simple_cnn_forward.1} parent=1 // pred_check
      _
    $region7: #{simple_cnn_forward.1} parent=1 // pred_check_branch
      %19 = sbr.rel (0) target = $region9
    $region8: #{simple_cnn_forward.1} parent=1 // pred_region
      _
    $region9: #{simple_cnn_forward.1} parent=1 // pred_fallthru
      _
    // Predicated region
    $region10: #{simple_cnn_forward.1} parent=1 // pred_check
      _
    $region11: #{simple_cnn_forward.1} parent=1 // pred_check_branch
      %21 = sbr.rel (0) target = $region13
    $region12: #{simple_cnn_forward.1} parent=1 // pred_region
      %22 = dma.done [#allocation3], 16
    $region13: #{simple_cnn_forward.1} parent=1 // pred_fallthru
      _
    %23 = sfence
    %s24 = sld [smem:[#allocation2]]
    %v25 = vld [vmem:[%s1] sm:$0xff]
    %v26 = vld [vmem:[%s1 + $0x10] sm:$0xff]
    %v27 = vstv %s24
    %v28 = vmul.f32 %v27, %v25
    %v29 = vmul.f32 %v27, %v26
    %v30 = vadd.f32 %v28, 0.0
    %v31 = vadd.f32 %v29, 0.0
    %s32 = sld [smem:[#allocation2 + $0x1]]
    %v33 = vld [vmem:[%s1] sm:$0xff]
    %v34 = vld [vmem:[%s1 + $0x8] sm:$0xff]
    %v35 = vld [vmem:[%s1 + $0x10] sm:$0xff]
    %v36 = vld [vmem:[%s1 + $0x18] sm:$0xff]
    %v37 = vstv %s32
    %v38 = vmul.f32 %v37, %v33
    %v39 = vmul.f32 %v37, %v34
    %v40 = vmul.f32 %v37, %v35
    %v41 = vmul.f32 %v37, %v36
    %v42 = vadd.f32 %v38, 0.0
    %v43 = vadd.f32 %v39, 0.0
    %v44 = vadd.f32 %v40, 0.0
    %v45 = vadd.f32 %v41, 0.0
    %s46 = sld [smem:[#allocation2 + $0x2]]
    %v47 = vstv %s46
    %v48 = vmul.f32 %v47, %v33
    %v49 = vmul.f32 %v47, %v34
    %v50 = vmul.f32 %v47, %v35
    %v51 = vmul.f32 %v47, %v36
    %v52 = vadd.f32 %v48, 0.0
    %v53 = vadd.f32 %v49, 0.0
    %v54 = vadd.f32 %v50, 0.0
    %v55 = vadd.f32 %v51, 0.0
    %s56 = sld [smem:[#allocation2 + $0x3]]
    %v57 = vstv %s56
    %v58 = vmul.f32 %v57, %v33
    %v59 = vmul.f32 %v57, %v34
    %v60 = vmul.f32 %v57, %v35
    %v61 = vmul.f32 %v57, %v36
    %v62 = vadd.f32 %v58, 0.0
    %v63 = vadd.f32 %v59, 0.0
    %v64 = vadd.f32 %v60, 0.0
    %v65 = vadd.f32 %v61, 0.0
    %s66 = sld [smem:[#allocation2 + $0x4]]
    %v67 = vstv %s66
    %v68 = vmul.f32 %v67, %v33
    %v69 = vmul.f32 %v67, %v34
    %v70 = vmul.f32 %v67, %v35
    %v71 = vmul.f32 %v67, %v36
    %76 = vrot.lane.b32.xlu0 %v68, 124
    %v77 = vpop.permute.xlu0 %76
    %78 = vrot.lane.b32.xlu0 %v69, 124
    %v79 = vpop.permute.xlu0 %78
    %80 = vrot.lane.b32.xlu0 %v70, 124
    %v81 = vpop.permute.xlu0 %80
    %82 = vrot.lane.b32.xlu0 %v71, 124
    %v83 = vpop.permute.xlu0 %82
    %vm84 = vcmask 1014784
    %v85 = vsel %vm84, %v77, %v79
    %v86 = vsel %vm84, %v81, %v83
    %v89 = vadd.f32 %v30, %v85
    %v90 = vadd.f32 %v31, %v86
    %s91 = sld [smem:[#allocation2 + $0x5]]
    %v92 = vstv %s91
    %v93 = vmul.f32 %v92, %v33
    %v94 = vmul.f32 %v92, %v34
    %v95 = vmul.f32 %v92, %v35
    %v96 = vmul.f32 %v92, %v36
    %101 = vrot.lane.b32.xlu0 %v93, 124
    %v102 = vpop.permute.xlu0 %101
    %103 = vrot.lane.b32.xlu0 %v94, 124
    %v104 = vpop.permute.xlu0 %103
    %105 = vrot.lane.b32.xlu0 %v95, 124
    %v106 = vpop.permute.xlu0 %105
    %107 = vrot.lane.b32.xlu0 %v96, 124
    %v108 = vpop.permute.xlu0 %107
    %v109 = vsel %vm84, %v102, %v104
    %v110 = vsel %vm84, %v106, %v108
    %v115 = vadd.f32 %v42, %v109
    %v116 = vadd.f32 %v43, %v104
    %v117 = vadd.f32 %v44, %v110
    %v118 = vadd.f32 %v45, %v108
    %s119 = sld [smem:[#allocation2 + $0x6]]
    %v120 = vstv %s119
    %v121 = vmul.f32 %v120, %v33
    %v122 = vmul.f32 %v120, %v34
    %v123 = vmul.f32 %v120, %v35
    %v124 = vmul.f32 %v120, %v36
    %129 = vrot.lane.b32.xlu0 %v121, 124
    %v130 = vpop.permute.xlu0 %129
    %131 = vrot.lane.b32.xlu0 %v122, 124
    %v132 = vpop.permute.xlu0 %131
    %133 = vrot.lane.b32.xlu0 %v123, 124
    %v134 = vpop.permute.xlu0 %133
    %135 = vrot.lane.b32.xlu0 %v124, 124
    %v136 = vpop.permute.xlu0 %135
    %v137 = vsel %vm84, %v130, %v132
    %v138 = vsel %vm84, %v134, %v136
    %v143 = vadd.f32 %v52, %v137
    %v144 = vadd.f32 %v53, %v132
    %v145 = vadd.f32 %v54, %v138
    %v146 = vadd.f32 %v55, %v136
    %s147 = sld [smem:[#allocation2 + $0x7]]
    %v148 = vld [vmem:[%s1] sm:$0xfe]
    %v149 = vld [vmem:[%s1 + $0x10] sm:$0xff]
    %v150 = vld [vmem:[%s1 + $0x20] sm:$0x1]
    %v151 = vstv %s147
    %v152 = vmul.f32 %v151, %v148
    %v153 = vmul.f32 %v151, %v149
    %v154 = vmul.f32 %v151, %v150
    %vm158 = vcmask 1046528
    %v159 = vrot.slane %v152, 1
    %v160 = vrot.slane %v153, 1
    %v161 = vsel %vm158, %v159, %v160
    %v162 = vrot.slane %v154, 1
    %v163 = vsel %vm158, %v160, %v162
    %164 = vrot.lane.b32.xlu0 %v161, 3
    %v165 = vpop.permute.xlu0 %164
    %166 = vrot.lane.b32.xlu0 %v163, 3
    %v167 = vpop.permute.xlu0 %166
    %v170 = vadd.f32 %v62, %v165
    %v171 = vadd.f32 %v63, %v165
    %v172 = vadd.f32 %v64, %v167
    %v173 = vadd.f32 %v65, %v167
    %s174 = sld [smem:[#allocation2 + $0x8]]
    %v175 = vld [vmem:[%s1] sm:$0xfe]
    %v176 = vld [vmem:[%s1 + $0x8] sm:$0xfe]
    %v177 = vld [vmem:[%s1 + $0x10] sm:$0xff]
    %v178 = vld [vmem:[%s1 + $0x18] sm:$0xff]
    %v179 = vld [vmem:[%s1 + $0x20] sm:$0x1]
    %v180 = vld [vmem:[%s1 + $0x28] sm:$0x1]
    %v181 = vstv %s174
    %v182 = vmul.f32 %v181, %v175
    %v183 = vmul.f32 %v181, %v176
    %v184 = vmul.f32 %v181, %v177
    %v185 = vmul.f32 %v181, %v178
    %v186 = vmul.f32 %v181, %v179
    %v187 = vmul.f32 %v181, %v180
    %v194 = vrot.slane %v182, 1
    %v195 = vrot.slane %v184, 1
    %v196 = vsel %vm158, %v194, %v195
    %v197 = vrot.slane %v183, 1
    %v198 = vrot.slane %v185, 1
    %v199 = vsel %vm158, %v197, %v198
    %v200 = vrot.slane %v186, 1
    %v201 = vsel %vm158, %v195, %v200
    %v202 = vrot.slane %v187, 1
    %v203 = vsel %vm158, %v198, %v202
    %204 = vrot.lane.b32.xlu0 %v196, 127
    %v205 = vpop.permute.xlu0 %204
    %206 = vrot.lane.b32.xlu0 %v199, 127
    %v207 = vpop.permute.xlu0 %206
    %208 = vrot.lane.b32.xlu0 %v201, 127
    %v209 = vpop.permute.xlu0 %208
    %210 = vrot.lane.b32.xlu0 %v203, 127
    %v211 = vpop.permute.xlu0 %210
    %vm212 = vcmask 1039360
    %v213 = vsel %vm212, %v205, %v207
    %v214 = vsel %vm212, %v209, %v211
    %v217 = vadd.f32 %v89, %v213
    %v218 = vadd.f32 %v90, %v214
    %s219 = sld [smem:[#allocation2 + $0x9]]
    %v220 = vstv %s219
    %v221 = vmul.f32 %v220, %v175
    %v222 = vmul.f32 %v220, %v176
    %v223 = vmul.f32 %v220, %v177
    %v224 = vmul.f32 %v220, %v178
    %v225 = vmul.f32 %v220, %v179
    %v226 = vmul.f32 %v220, %v180
    %v233 = vrot.slane %v221, 1
    %v234 = vrot.slane %v223, 1
    %v235 = vsel %vm158, %v233, %v234
    %v236 = vrot.slane %v222, 1
    %v237 = vrot.slane %v224, 1
    %v238 = vsel %vm158, %v236, %v237
    %v239 = vrot.slane %v225, 1
    %v240 = vsel %vm158, %v234, %v239
    %v241 = vrot.slane %v226, 1
    %v242 = vsel %vm158, %v237, %v241
    %243 = vrot.lane.b32.xlu0 %v235, 127
    %v244 = vpop.permute.xlu0 %243
    %245 = vrot.lane.b32.xlu0 %v238, 127
    %v246 = vpop.permute.xlu0 %245
    %247 = vrot.lane.b32.xlu0 %v240, 127
    %v248 = vpop.permute.xlu0 %247
    %249 = vrot.lane.b32.xlu0 %v242, 127
    %v250 = vpop.permute.xlu0 %249
    %v251 = vsel %vm212, %v244, %v246
    %v252 = vsel %vm212, %v248, %v250
    %v257 = vadd.f32 %v115, %v251
    %v258 = vadd.f32 %v116, %v246
    %v259 = vadd.f32 %v117, %v252
    %v260 = vadd.f32 %v118, %v250
    %s261 = sld [smem:[#allocation2 + $0xa]]
    %v262 = vstv %s261
    %v263 = vmul.f32 %v262, %v175
    %v264 = vmul.f32 %v262, %v176
    %v265 = vmul.f32 %v262, %v177
    %v266 = vmul.f32 %v262, %v178
    %v267 = vmul.f32 %v262, %v179
    %v268 = vmul.f32 %v262, %v180
    %v275 = vrot.slane %v263, 1
    %v276 = vrot.slane %v265, 1
    %v277 = vsel %vm158, %v275, %v276
    %v278 = vrot.slane %v264, 1
    %v279 = vrot.slane %v266, 1
    %v280 = vsel %vm158, %v278, %v279
    %v281 = vrot.slane %v267, 1
    %v282 = vsel %vm158, %v276, %v281
    %v283 = vrot.slane %v268, 1
    %v284 = vsel %vm158, %v279, %v283
    %285 = vrot.lane.b32.xlu0 %v277, 127
    %v286 = vpop.permute.xlu0 %285
    %287 = vrot.lane.b32.xlu0 %v280, 127
    %v288 = vpop.permute.xlu0 %287
    %289 = vrot.lane.b32.xlu0 %v282, 127
    %v290 = vpop.permute.xlu0 %289
    %291 = vrot.lane.b32.xlu0 %v284, 127
    %v292 = vpop.permute.xlu0 %291
    %v293 = vsel %vm212, %v286, %v288
    %v294 = vsel %vm212, %v290, %v292
    %v299 = vadd.f32 %v143, %v293
    %v300 = vadd.f32 %v144, %v288
    %v301 = vadd.f32 %v145, %v294
    %v302 = vadd.f32 %v146, %v292
    %s303 = sld [smem:[#allocation2 + $0xb]]
    %v304 = vstv %s303
    %v305 = vmul.f32 %v304, %v175
    %v306 = vmul.f32 %v304, %v176
    %v307 = vmul.f32 %v304, %v177
    %v308 = vmul.f32 %v304, %v178
    %v309 = vmul.f32 %v304, %v179
    %v310 = vmul.f32 %v304, %v180
    %v317 = vrot.slane %v305, 1
    %v318 = vrot.slane %v307, 1
    %v319 = vsel %vm158, %v317, %v318
    %v320 = vrot.slane %v306, 1
    %v321 = vrot.slane %v308, 1
    %v322 = vsel %vm158, %v320, %v321
    %v323 = vrot.slane %v309, 1
    %v324 = vsel %vm158, %v318, %v323
    %v325 = vrot.slane %v310, 1
    %v326 = vsel %vm158, %v321, %v325
    %327 = vrot.lane.b32.xlu0 %v319, 127
    %v328 = vpop.permute.xlu0 %327
    %329 = vrot.lane.b32.xlu0 %v322, 127
    %v330 = vpop.permute.xlu0 %329
    %331 = vrot.lane.b32.xlu0 %v324, 127
    %v332 = vpop.permute.xlu0 %331
    %333 = vrot.lane.b32.xlu0 %v326, 127
    %v334 = vpop.permute.xlu0 %333
    %v335 = vsel %vm212, %v328, %v330
    %v336 = vsel %vm212, %v332, %v334
    %v341 = vadd.f32 %v170, %v335
    %v342 = vadd.f32 %v171, %v330
    %v343 = vadd.f32 %v172, %v336
    %v344 = vadd.f32 %v173, %v334
    %s345 = sld [smem:[#allocation2 + $0xc]]
    %v346 = vstv %s345
    %v347 = vmul.f32 %v346, %v175
    %v348 = vmul.f32 %v346, %v176
    %v349 = vmul.f32 %v346, %v177
    %v350 = vmul.f32 %v346, %v178
    %v351 = vmul.f32 %v346, %v179
    %v352 = vmul.f32 %v346, %v180
    %v359 = vrot.slane %v347, 1
    %v360 = vrot.slane %v349, 1
    %v361 = vsel %vm158, %v359, %v360
    %v362 = vrot.slane %v348, 1
    %v363 = vrot.slane %v350, 1
    %v364 = vsel %vm158, %v362, %v363
    %v365 = vrot.slane %v351, 1
    %v366 = vsel %vm158, %v360, %v365
    %v367 = vrot.slane %v352, 1
    %v368 = vsel %vm158, %v363, %v367
    %369 = vrot.lane.b32.xlu0 %v361, 123
    %v370 = vpop.permute.xlu0 %369
    %371 = vrot.lane.b32.xlu0 %v364, 123
    %v372 = vpop.permute.xlu0 %371
    %373 = vrot.lane.b32.xlu0 %v366, 123
    %v374 = vpop.permute.xlu0 %373
    %375 = vrot.lane.b32.xlu0 %v368, 123
    %v376 = vpop.permute.xlu0 %375
    %vm377 = vcmask 1006592
    %v378 = vsel %vm377, %v370, %v372
    %v379 = vsel %vm377, %v374, %v376
    %v382 = vadd.f32 %v217, %v378
    %v383 = vadd.f32 %v218, %v379
    %s384 = sld [smem:[#allocation2 + $0xd]]
    %v385 = vstv %s384
    %v386 = vmul.f32 %v385, %v175
    %v387 = vmul.f32 %v385, %v176
    %v388 = vmul.f32 %v385, %v177
    %v389 = vmul.f32 %v385, %v178
    %v390 = vmul.f32 %v385, %v179
    %v391 = vmul.f32 %v385, %v180
    %v398 = vrot.slane %v386, 1
    %v399 = vrot.slane %v388, 1
    %v400 = vsel %vm158, %v398, %v399
    %v401 = vrot.slane %v387, 1
    %v402 = vrot.slane %v389, 1
    %v403 = vsel %vm158, %v401, %v402
    %v404 = vrot.slane %v390, 1
    %v405 = vsel %vm158, %v399, %v404
    %v406 = vrot.slane %v391, 1
    %v407 = vsel %vm158, %v402, %v406
    %408 = vrot.lane.b32.xlu0 %v400, 123
    %v409 = vpop.permute.xlu0 %408
    %410 = vrot.lane.b32.xlu0 %v403, 123
    %v411 = vpop.permute.xlu0 %410
    %412 = vrot.lane.b32.xlu0 %v405, 123
    %v413 = vpop.permute.xlu0 %412
    %414 = vrot.lane.b32.xlu0 %v407, 123
    %v415 = vpop.permute.xlu0 %414
    %v416 = vsel %vm377, %v409, %v411
    %v417 = vsel %vm377, %v413, %v415
    %v422 = vadd.f32 %v257, %v416
    %v423 = vadd.f32 %v258, %v411
    %v424 = vadd.f32 %v259, %v417
    %v425 = vadd.f32 %v260, %v415
    %s426 = sld [smem:[#allocation2 + $0xe]]
    %v427 = vld [vmem:[%s1] sm:$0xfc]
    %v428 = vld [vmem:[%s1 + $0x20] sm:$0x3]
    %v429 = vstv %s426
    %v430 = vmul.f32 %v429, %v427
    %v431 = vmul.f32 %v429, %v149
    %v432 = vmul.f32 %v429, %v428
    %vm436 = vcmask 1045504
    %v437 = vrot.slane %v430, 2
    %v438 = vrot.slane %v431, 2
    %v439 = vsel %vm436, %v437, %v438
    %v440 = vrot.slane %v432, 2
    %v441 = vsel %vm436, %v438, %v440
    %442 = vrot.lane.b32.xlu0 %v439, 2
    %v443 = vpop.permute.xlu0 %442
    %444 = vrot.lane.b32.xlu0 %v441, 2
    %v445 = vpop.permute.xlu0 %444
    %v448 = vadd.f32 %v299, %v443
    %v449 = vadd.f32 %v300, %v443
    %v450 = vadd.f32 %v301, %v445
    %v451 = vadd.f32 %v302, %v445
    %s452 = sld [smem:[#allocation2 + $0xf]]
    %v453 = vld [vmem:[%s1] sm:$0xfc]
    %v454 = vld [vmem:[%s1 + $0x8] sm:$0xfc]
    %v455 = vld [vmem:[%s1 + $0x20] sm:$0x3]
    %v456 = vld [vmem:[%s1 + $0x28] sm:$0x3]
    %v457 = vstv %s452
    %v458 = vmul.f32 %v457, %v453
    %v459 = vmul.f32 %v457, %v454
    %v460 = vmul.f32 %v457, %v177
    %v461 = vmul.f32 %v457, %v178
    %v462 = vmul.f32 %v457, %v455
    %v463 = vmul.f32 %v457, %v456
    %v470 = vrot.slane %v458, 2
    %v471 = vrot.slane %v460, 2
    %v472 = vsel %vm436, %v470, %v471
    %v473 = vrot.slane %v459, 2
    %v474 = vrot.slane %v461, 2
    %v475 = vsel %vm436, %v473, %v474
    %v476 = vrot.slane %v462, 2
    %v477 = vsel %vm436, %v471, %v476
    %v478 = vrot.slane %v463, 2
    %v479 = vsel %vm436, %v474, %v478
    %480 = vrot.lane.b32.xlu0 %v472, 2
    %v481 = vpop.permute.xlu0 %480
    %482 = vrot.lane.b32.xlu0 %v475, 2
    %v483 = vpop.permute.xlu0 %482
    %484 = vrot.lane.b32.xlu0 %v477, 2
    %v485 = vpop.permute.xlu0 %484
    %486 = vrot.lane.b32.xlu0 %v479, 2
    %v487 = vpop.permute.xlu0 %486
    %vm488 = vcmask 15360
    %v489 = vsel %vm488, %v481, %v483
    %v490 = vsel %vm488, %v485, %v487
    %v495 = vadd.f32 %v341, %v481
    %v496 = vadd.f32 %v342, %v489
    %v497 = vadd.f32 %v343, %v485
    %v498 = vadd.f32 %v344, %v490
    %s499 = sld [smem:[#allocation2 + $0x10]]
    %v500 = vstv %s499
    %v501 = vmul.f32 %v500, %v453
    %v502 = vmul.f32 %v500, %v454
    %v503 = vmul.f32 %v500, %v177
    %v504 = vmul.f32 %v500, %v178
    %v505 = vmul.f32 %v500, %v455
    %v506 = vmul.f32 %v500, %v456
    %v513 = vrot.slane %v501, 2
    %v514 = vrot.slane %v503, 2
    %v515 = vsel %vm436, %v513, %v514
    %v516 = vrot.slane %v502, 2
    %v517 = vrot.slane %v504, 2
    %v518 = vsel %vm436, %v516, %v517
    %v519 = vrot.slane %v505, 2
    %v520 = vsel %vm436, %v514, %v519
    %v521 = vrot.slane %v506, 2
    %v522 = vsel %vm436, %v517, %v521
    %523 = vrot.lane.b32.xlu0 %v515, 126
    %v524 = vpop.permute.xlu0 %523
    %525 = vrot.lane.b32.xlu0 %v518, 126
    %v526 = vpop.permute.xlu0 %525
    %527 = vrot.lane.b32.xlu0 %v520, 126
    %v528 = vpop.permute.xlu0 %527
    %529 = vrot.lane.b32.xlu0 %v522, 126
    %v530 = vpop.permute.xlu0 %529
    %vm531 = vcmask 1031168
    %v532 = vsel %vm531, %v524, %v526
    %v533 = vsel %vm531, %v528, %v530
    %v536 = vadd.f32 %v382, %v532
    %v537 = vadd.f32 %v383, %v533
    %s538 = sld [smem:[#allocation2 + $0x11]]
    %v539 = vstv %s538
    %v540 = vmul.f32 %v539, %v453
    %v541 = vmul.f32 %v539, %v454
    %v542 = vmul.f32 %v539, %v177
    %v543 = vmul.f32 %v539, %v178
    %v544 = vmul.f32 %v539, %v455
    %v545 = vmul.f32 %v539, %v456
    %v552 = vrot.slane %v540, 2
    %v553 = vrot.slane %v542, 2
    %v554 = vsel %vm436, %v552, %v553
    %v555 = vrot.slane %v541, 2
    %v556 = vrot.slane %v543, 2
    %v557 = vsel %vm436, %v555, %v556
    %v558 = vrot.slane %v544, 2
    %v559 = vsel %vm436, %v553, %v558
    %v560 = vrot.slane %v545, 2
    %v561 = vsel %vm436, %v556, %v560
    %562 = vrot.lane.b32.xlu0 %v554, 126
    %v563 = vpop.permute.xlu0 %562
    %564 = vrot.lane.b32.xlu0 %v557, 126
    %v565 = vpop.permute.xlu0 %564
    %566 = vrot.lane.b32.xlu0 %v559, 126
    %v567 = vpop.permute.xlu0 %566
    %568 = vrot.lane.b32.xlu0 %v561, 126
    %v569 = vpop.permute.xlu0 %568
    %v570 = vsel %vm531, %v563, %v565
    %v571 = vsel %vm531, %v567, %v569
    %v576 = vadd.f32 %v422, %v570
    %v577 = vadd.f32 %v423, %v565
    %v578 = vadd.f32 %v424, %v571
    %v579 = vadd.f32 %v425, %v569
    %s580 = sld [smem:[#allocation2 + $0x12]]
    %v581 = vstv %s580
    %v582 = vmul.f32 %v581, %v453
    %v583 = vmul.f32 %v581, %v454
    %v584 = vmul.f32 %v581, %v177
    %v585 = vmul.f32 %v581, %v178
    %v586 = vmul.f32 %v581, %v455
    %v587 = vmul.f32 %v581, %v456
    %v594 = vrot.slane %v582, 2
    %v595 = vrot.slane %v584, 2
    %v596 = vsel %vm436, %v594, %v595
    %v597 = vrot.slane %v583, 2
    %v598 = vrot.slane %v585, 2
    %v599 = vsel %vm436, %v597, %v598
    %v600 = vrot.slane %v586, 2
    %v601 = vsel %vm436, %v595, %v600
    %v602 = vrot.slane %v587, 2
    %v603 = vsel %vm436, %v598, %v602
    %604 = vrot.lane.b32.xlu0 %v596, 126
    %v605 = vpop.permute.xlu0 %604
    %606 = vrot.lane.b32.xlu0 %v599, 126
    %v607 = vpop.permute.xlu0 %606
    %608 = vrot.lane.b32.xlu0 %v601, 126
    %v609 = vpop.permute.xlu0 %608
    %610 = vrot.lane.b32.xlu0 %v603, 126
    %v611 = vpop.permute.xlu0 %610
    %v612 = vsel %vm531, %v605, %v607
    %v613 = vsel %vm531, %v609, %v611
    %v618 = vadd.f32 %v448, %v612
    %v619 = vadd.f32 %v449, %v607
    %v620 = vadd.f32 %v450, %v613
    %v621 = vadd.f32 %v451, %v611
    %s622 = sld [smem:[#allocation2 + $0x13]]
    %v623 = vstv %s622
    %v624 = vmul.f32 %v623, %v453
    %v625 = vmul.f32 %v623, %v454
    %v626 = vmul.f32 %v623, %v177
    %v627 = vmul.f32 %v623, %v178
    %v628 = vmul.f32 %v623, %v455
    %v629 = vmul.f32 %v623, %v456
    %v636 = vrot.slane %v624, 2
    %v637 = vrot.slane %v626, 2
    %v638 = vsel %vm436, %v636, %v637
    %v639 = vrot.slane %v625, 2
    %v640 = vrot.slane %v627, 2
    %v641 = vsel %vm436, %v639, %v640
    %v642 = vrot.slane %v628, 2
    %v643 = vsel %vm436, %v637, %v642
    %v644 = vrot.slane %v629, 2
    %v645 = vsel %vm436, %v640, %v644
    %646 = vrot.lane.b32.xlu0 %v638, 126
    %v647 = vpop.permute.xlu0 %646
    %648 = vrot.lane.b32.xlu0 %v641, 126
    %v649 = vpop.permute.xlu0 %648
    %650 = vrot.lane.b32.xlu0 %v643, 126
    %v651 = vpop.permute.xlu0 %650
    %652 = vrot.lane.b32.xlu0 %v645, 126
    %v653 = vpop.permute.xlu0 %652
    %v654 = vsel %vm531, %v647, %v649
    %v655 = vsel %vm531, %v651, %v653
    %v660 = vadd.f32 %v495, %v654
    %v661 = vadd.f32 %v496, %v649
    %v662 = vadd.f32 %v497, %v655
    %v663 = vadd.f32 %v498, %v653
    %s664 = sld [smem:[#allocation2 + $0x14]]
    %v665 = vstv %s664
    %v666 = vmul.f32 %v665, %v453
    %v667 = vmul.f32 %v665, %v454
    %v668 = vmul.f32 %v665, %v177
    %v669 = vmul.f32 %v665, %v178
    %v670 = vmul.f32 %v665, %v455
    %v671 = vmul.f32 %v665, %v456
    %v678 = vrot.slane %v666, 2
    %v679 = vrot.slane %v668, 2
    %v680 = vsel %vm436, %v678, %v679
    %v681 = vrot.slane %v667, 2
    %v682 = vrot.slane %v669, 2
    %v683 = vsel %vm436, %v681, %v682
    %v684 = vrot.slane %v670, 2
    %v685 = vsel %vm436, %v679, %v684
    %v686 = vrot.slane %v671, 2
    %v687 = vsel %vm436, %v682, %v686
    %688 = vrot.lane.b32.xlu0 %v680, 122
    %v689 = vpop.permute.xlu0 %688
    %690 = vrot.lane.b32.xlu0 %v683, 122
    %v691 = vpop.permute.xlu0 %690
    %692 = vrot.lane.b32.xlu0 %v685, 122
    %v693 = vpop.permute.xlu0 %692
    %694 = vrot.lane.b32.xlu0 %v687, 122
    %v695 = vpop.permute.xlu0 %694
    %vm696 = vcmask 998400
    %v697 = vsel %vm696, %v689, %v691
    %v698 = vsel %vm696, %v693, %v695
    %v701 = vadd.f32 %v536, %v697
    %v702 = vadd.f32 %v537, %v698
    %s703 = sld [smem:[#allocation2 + $0x15]]
    %v704 = vld [vmem:[%s1] sm:$0xf8]
    %v705 = vld [vmem:[%s1 + $0x20] sm:$0x7]
    %v706 = vstv %s703
    %v707 = vmul.f32 %v706, %v704
    %v708 = vmul.f32 %v706, %v149
    %v709 = vmul.f32 %v706, %v705
    %vm713 = vcmask 1044480
    %v714 = vrot.slane %v707, 3
    %v715 = vrot.slane %v708, 3
    %v716 = vsel %vm713, %v714, %v715
    %v717 = vrot.slane %v709, 3
    %v718 = vsel %vm713, %v715, %v717
    %719 = vrot.lane.b32.xlu0 %v716, 1
    %v720 = vpop.permute.xlu0 %719
    %721 = vrot.lane.b32.xlu0 %v718, 1
    %v722 = vpop.permute.xlu0 %721
    %v725 = vadd.f32 %v576, %v720
    %v726 = vadd.f32 %v577, %v720
    %v727 = vadd.f32 %v578, %v722
    %v728 = vadd.f32 %v579, %v722
    %s729 = sld [smem:[#allocation2 + $0x16]]
    %v730 = vld [vmem:[%s1] sm:$0xf8]
    %v731 = vld [vmem:[%s1 + $0x8] sm:$0xf8]
    %v732 = vld [vmem:[%s1 + $0x20] sm:$0x7]
    %v733 = vld [vmem:[%s1 + $0x28] sm:$0x7]
    %v734 = vstv %s729
    %v735 = vmul.f32 %v734, %v730
    %v736 = vmul.f32 %v734, %v731
    %v737 = vmul.f32 %v734, %v177
    %v738 = vmul.f32 %v734, %v178
    %v739 = vmul.f32 %v734, %v732
    %v740 = vmul.f32 %v734, %v733
    %v747 = vrot.slane %v735, 3
    %v748 = vrot.slane %v737, 3
    %v749 = vsel %vm713, %v747, %v748
    %v750 = vrot.slane %v736, 3
    %v751 = vrot.slane %v738, 3
    %v752 = vsel %vm713, %v750, %v751
    %v753 = vrot.slane %v739, 3
    %v754 = vsel %vm713, %v748, %v753
    %v755 = vrot.slane %v740, 3
    %v756 = vsel %vm713, %v751, %v755
    %757 = vrot.lane.b32.xlu0 %v749, 1
    %v758 = vpop.permute.xlu0 %757
    %759 = vrot.lane.b32.xlu0 %v752, 1
    %v760 = vpop.permute.xlu0 %759
    %761 = vrot.lane.b32.xlu0 %v754, 1
    %v762 = vpop.permute.xlu0 %761
    %763 = vrot.lane.b32.xlu0 %v756, 1
    %v764 = vpop.permute.xlu0 %763
    %vm765 = vcmask 7168
    %v766 = vsel %vm765, %v758, %v760
    %v767 = vsel %vm765, %v762, %v764
    %v772 = vadd.f32 %v618, %v758
    %v773 = vadd.f32 %v619, %v766
    %v774 = vadd.f32 %v620, %v762
    %v775 = vadd.f32 %v621, %v767
    %s776 = sld [smem:[#allocation2 + $0x17]]
    %v777 = vstv %s776
    %v778 = vmul.f32 %v777, %v730
    %v779 = vmul.f32 %v777, %v731
    %v780 = vmul.f32 %v777, %v177
    %v781 = vmul.f32 %v777, %v178
    %v782 = vmul.f32 %v777, %v732
    %v783 = vmul.f32 %v777, %v733
    %v790 = vrot.slane %v778, 3
    %v791 = vrot.slane %v780, 3
    %v792 = vsel %vm713, %v790, %v791
    %v793 = vrot.slane %v779, 3
    %v794 = vrot.slane %v781, 3
    %v795 = vsel %vm713, %v793, %v794
    %v796 = vrot.slane %v782, 3
    %v797 = vsel %vm713, %v791, %v796
    %v798 = vrot.slane %v783, 3
    %v799 = vsel %vm713, %v794, %v798
    %800 = vrot.lane.b32.xlu0 %v792, 1
    %v801 = vpop.permute.xlu0 %800
    %802 = vrot.lane.b32.xlu0 %v795, 1
    %v803 = vpop.permute.xlu0 %802
    %804 = vrot.lane.b32.xlu0 %v797, 1
    %v805 = vpop.permute.xlu0 %804
    %806 = vrot.lane.b32.xlu0 %v799, 1
    %v807 = vpop.permute.xlu0 %806
    %v808 = vsel %vm765, %v801, %v803
    %v809 = vsel %vm765, %v805, %v807
    %v814 = vadd.f32 %v660, %v801
    %v815 = vadd.f32 %v661, %v808
    %v816 = vadd.f32 %v662, %v805
    %v817 = vadd.f32 %v663, %v809
    %s818 = sld [smem:[#allocation2 + $0x18]]
    %v819 = vstv %s818
    %v820 = vmul.f32 %v819, %v730
    %v821 = vmul.f32 %v819, %v731
    %v822 = vmul.f32 %v819, %v177
    %v823 = vmul.f32 %v819, %v178
    %v824 = vmul.f32 %v819, %v732
    %v825 = vmul.f32 %v819, %v733
    %v832 = vrot.slane %v820, 3
    %v833 = vrot.slane %v822, 3
    %v834 = vsel %vm713, %v832, %v833
    %v835 = vrot.slane %v821, 3
    %v836 = vrot.slane %v823, 3
    %v837 = vsel %vm713, %v835, %v836
    %v838 = vrot.slane %v824, 3
    %v839 = vsel %vm713, %v833, %v838
    %v840 = vrot.slane %v825, 3
    %v841 = vsel %vm713, %v836, %v840
    %842 = vrot.lane.b32.xlu0 %v834, 125
    %v843 = vpop.permute.xlu0 %842
    %844 = vrot.lane.b32.xlu0 %v837, 125
    %v845 = vpop.permute.xlu0 %844
    %846 = vrot.lane.b32.xlu0 %v839, 125
    %v847 = vpop.permute.xlu0 %846
    %848 = vrot.lane.b32.xlu0 %v841, 125
    %v849 = vpop.permute.xlu0 %848
    %vm850 = vcmask 1022976
    %v851 = vsel %vm850, %v843, %v845
    %v852 = vsel %vm850, %v847, %v849
    %v855 = vadd.f32 %v701, %v851
    %v856 = vadd.f32 %v702, %v852
    %s857 = sld [smem:[#allocation2 + $0x19]]
    %v858 = vstv %s857
    %v859 = vmul.f32 %v858, %v730
    %v860 = vmul.f32 %v858, %v731
    %v861 = vmul.f32 %v858, %v177
    %v862 = vmul.f32 %v858, %v178
    %v863 = vmul.f32 %v858, %v732
    %v864 = vmul.f32 %v858, %v733
    %v871 = vrot.slane %v859, 3
    %v872 = vrot.slane %v861, 3
    %v873 = vsel %vm713, %v871, %v872
    %v874 = vrot.slane %v860, 3
    %v875 = vrot.slane %v862, 3
    %v876 = vsel %vm713, %v874, %v875
    %v877 = vrot.slane %v863, 3
    %v878 = vsel %vm713, %v872, %v877
    %v879 = vrot.slane %v864, 3
    %v880 = vsel %vm713, %v875, %v879
    %881 = vrot.lane.b32.xlu0 %v873, 125
    %v882 = vpop.permute.xlu0 %881
    %883 = vrot.lane.b32.xlu0 %v876, 125
    %v884 = vpop.permute.xlu0 %883
    %885 = vrot.lane.b32.xlu0 %v878, 125
    %v886 = vpop.permute.xlu0 %885
    %887 = vrot.lane.b32.xlu0 %v880, 125
    %v888 = vpop.permute.xlu0 %887
    %v889 = vsel %vm850, %v882, %v884
    %v890 = vsel %vm850, %v886, %v888
    %v895 = vadd.f32 %v725, %v889
    %v896 = vadd.f32 %v726, %v884
    %v897 = vadd.f32 %v727, %v890
    %v898 = vadd.f32 %v728, %v888
    %s899 = sld [smem:[#allocation2 + $0x1a]]
    %v900 = vstv %s899
    %v901 = vmul.f32 %v900, %v730
    %v902 = vmul.f32 %v900, %v731
    %v903 = vmul.f32 %v900, %v177
    %v904 = vmul.f32 %v900, %v178
    %v905 = vmul.f32 %v900, %v732
    %v906 = vmul.f32 %v900, %v733
    %v913 = vrot.slane %v901, 3
    %v914 = vrot.slane %v903, 3
    %v915 = vsel %vm713, %v913, %v914
    %v916 = vrot.slane %v902, 3
    %v917 = vrot.slane %v904, 3
    %v918 = vsel %vm713, %v916, %v917
    %v919 = vrot.slane %v905, 3
    %v920 = vsel %vm713, %v914, %v919
    %v921 = vrot.slane %v906, 3
    %v922 = vsel %vm713, %v917, %v921
    %923 = vrot.lane.b32.xlu0 %v915, 125
    %v924 = vpop.permute.xlu0 %923
    %925 = vrot.lane.b32.xlu0 %v918, 125
    %v926 = vpop.permute.xlu0 %925
    %927 = vrot.lane.b32.xlu0 %v920, 125
    %v928 = vpop.permute.xlu0 %927
    %929 = vrot.lane.b32.xlu0 %v922, 125
    %v930 = vpop.permute.xlu0 %929
    %v931 = vsel %vm850, %v924, %v926
    %v932 = vsel %vm850, %v928, %v930
    %v937 = vadd.f32 %v772, %v931
    %v938 = vadd.f32 %v773, %v926
    %v939 = vadd.f32 %v774, %v932
    %v940 = vadd.f32 %v775, %v930
    %s941 = sld [smem:[#allocation2 + $0x1b]]
    %v942 = vstv %s941
    %v943 = vmul.f32 %v942, %v730
    %v944 = vmul.f32 %v942, %v731
    %v945 = vmul.f32 %v942, %v177
    %v946 = vmul.f32 %v942, %v178
    %v947 = vmul.f32 %v942, %v732
    %v948 = vmul.f32 %v942, %v733
    %v955 = vrot.slane %v943, 3
    %v956 = vrot.slane %v945, 3
    %v957 = vsel %vm713, %v955, %v956
    %v958 = vrot.slane %v944, 3
    %v959 = vrot.slane %v946, 3
    %v960 = vsel %vm713, %v958, %v959
    %v961 = vrot.slane %v947, 3
    %v962 = vsel %vm713, %v956, %v961
    %v963 = vrot.slane %v948, 3
    %v964 = vsel %vm713, %v959, %v963
    %965 = vrot.lane.b32.xlu0 %v957, 125
    %v966 = vpop.permute.xlu0 %965
    %967 = vrot.lane.b32.xlu0 %v960, 125
    %v968 = vpop.permute.xlu0 %967
    %969 = vrot.lane.b32.xlu0 %v962, 125
    %v970 = vpop.permute.xlu0 %969
    %971 = vrot.lane.b32.xlu0 %v964, 125
    %v972 = vpop.permute.xlu0 %971
    %v973 = vsel %vm850, %v966, %v968
    %v974 = vsel %vm850, %v970, %v972
    %v979 = vadd.f32 %v814, %v973
    %v980 = vadd.f32 %v815, %v968
    %v981 = vadd.f32 %v816, %v974
    %v982 = vadd.f32 %v817, %v972
    %s983 = sld [smem:[#allocation2 + $0x1c]]
    %v984 = vld [vmem:[%s1] sm:$0xf0]
    %v985 = vld [vmem:[%s1 + $0x20] sm:$0xf]
    %v986 = vstv %s983
    %v987 = vmul.f32 %v986, %v984
    %v988 = vmul.f32 %v986, %v149
    %v989 = vmul.f32 %v986, %v985
    %vm993 = vcmask 1043456
    %v994 = vrot.slane %v987, 4
    %v995 = vrot.slane %v988, 4
    %v996 = vsel %vm993, %v994, %v995
    %v997 = vrot.slane %v989, 4
    %v998 = vsel %vm993, %v995, %v997
    %v1001 = vadd.f32 %v855, %v996
    %v1002 = vadd.f32 %v856, %v998
    %s1003 = sld [smem:[#allocation2 + $0x1d]]
    %v1004 = vld [vmem:[%s1] sm:$0xf0]
    %v1005 = vld [vmem:[%s1 + $0x8] sm:$0xf0]
    %v1006 = vld [vmem:[%s1 + $0x20] sm:$0xf]
    %v1007 = vld [vmem:[%s1 + $0x28] sm:$0xf]
    %v1008 = vstv %s1003
    %v1009 = vmul.f32 %v1008, %v1004
    %v1010 = vmul.f32 %v1008, %v1005
    %v1011 = vmul.f32 %v1008, %v177
    %v1012 = vmul.f32 %v1008, %v178
    %v1013 = vmul.f32 %v1008, %v1006
    %v1014 = vmul.f32 %v1008, %v1007
    %v1021 = vrot.slane %v1009, 4
    %v1022 = vrot.slane %v1011, 4
    %v1023 = vsel %vm993, %v1021, %v1022
    %v1024 = vrot.slane %v1010, 4
    %v1025 = vrot.slane %v1012, 4
    %v1026 = vsel %vm993, %v1024, %v1025
    %v1027 = vrot.slane %v1013, 4
    %v1028 = vsel %vm993, %v1022, %v1027
    %v1029 = vrot.slane %v1014, 4
    %v1030 = vsel %vm993, %v1025, %v1029
    %v1035 = vadd.f32 %v895, %v1023
    %v1036 = vadd.f32 %v896, %v1026
    %v1037 = vadd.f32 %v897, %v1028
    %v1038 = vadd.f32 %v898, %v1030
    %s1039 = sld [smem:[#allocation2 + $0x1e]]
    %v1040 = vstv %s1039
    %v1041 = vmul.f32 %v1040, %v1004
    %v1042 = vmul.f32 %v1040, %v1005
    %v1043 = vmul.f32 %v1040, %v177
    %v1044 = vmul.f32 %v1040, %v178
    %v1045 = vmul.f32 %v1040, %v1006
    %v1046 = vmul.f32 %v1040, %v1007
    %v1053 = vrot.slane %v1041, 4
    %v1054 = vrot.slane %v1043, 4
    %v1055 = vsel %vm993, %v1053, %v1054
    %v1056 = vrot.slane %v1042, 4
    %v1057 = vrot.slane %v1044, 4
    %v1058 = vsel %vm993, %v1056, %v1057
    %v1059 = vrot.slane %v1045, 4
    %v1060 = vsel %vm993, %v1054, %v1059
    %v1061 = vrot.slane %v1046, 4
    %v1062 = vsel %vm993, %v1057, %v1061
    %v1067 = vadd.f32 %v937, %v1055
    %v1068 = vadd.f32 %v938, %v1058
    %v1069 = vadd.f32 %v939, %v1060
    %v1070 = vadd.f32 %v940, %v1062
    %s1071 = sld [smem:[#allocation2 + $0x1f]]
    %v1072 = vstv %s1071
    %v1073 = vmul.f32 %v1072, %v1004
    %v1074 = vmul.f32 %v1072, %v1005
    %v1075 = vmul.f32 %v1072, %v177
    %v1076 = vmul.f32 %v1072, %v178
    %v1077 = vmul.f32 %v1072, %v1006
    %v1078 = vmul.f32 %v1072, %v1007
    %v1085 = vrot.slane %v1073, 4
    %v1086 = vrot.slane %v1075, 4
    %v1087 = vsel %vm993, %v1085, %v1086
    %v1088 = vrot.slane %v1074, 4
    %v1089 = vrot.slane %v1076, 4
    %v1090 = vsel %vm993, %v1088, %v1089
    %v1091 = vrot.slane %v1077, 4
    %v1092 = vsel %vm993, %v1086, %v1091
    %v1093 = vrot.slane %v1078, 4
    %v1094 = vsel %vm993, %v1089, %v1093
    %v1099 = vadd.f32 %v979, %v1087
    %v1100 = vadd.f32 %v980, %v1090
    %v1101 = vadd.f32 %v981, %v1092
    %v1102 = vadd.f32 %v982, %v1094
    %s1103 = sld [smem:[#allocation2 + $0x20]]
    %v1104 = vstv %s1103
    %v1105 = vmul.f32 %v1104, %v1004
    %v1106 = vmul.f32 %v1104, %v1005
    %v1107 = vmul.f32 %v1104, %v177
    %v1108 = vmul.f32 %v1104, %v178
    %v1109 = vmul.f32 %v1104, %v1006
    %v1110 = vmul.f32 %v1104, %v1007
    %v1117 = vrot.slane %v1105, 4
    %v1118 = vrot.slane %v1107, 4
    %v1119 = vsel %vm993, %v1117, %v1118
    %v1120 = vrot.slane %v1106, 4
    %v1121 = vrot.slane %v1108, 4
    %v1122 = vsel %vm993, %v1120, %v1121
    %v1123 = vrot.slane %v1109, 4
    %v1124 = vsel %vm993, %v1118, %v1123
    %v1125 = vrot.slane %v1110, 4
    %v1126 = vsel %vm993, %v1121, %v1125
    %1127 = vrot.lane.b32.xlu0 %v1119, 124
    %v1128 = vpop.permute.xlu0 %1127
    %1129 = vrot.lane.b32.xlu0 %v1122, 124
    %v1130 = vpop.permute.xlu0 %1129
    %1131 = vrot.lane.b32.xlu0 %v1124, 124
    %v1132 = vpop.permute.xlu0 %1131
    %1133 = vrot.lane.b32.xlu0 %v1126, 124
    %v1134 = vpop.permute.xlu0 %1133
    %v1135 = vsel %vm84, %v1128, %v1130
    %v1136 = vsel %vm84, %v1132, %v1134
    %v1139 = vadd.f32 %v1001, %v1135
    %v1140 = vadd.f32 %v1002, %v1136
    %s1141 = sld [smem:[#allocation2 + $0x21]]
    %v1142 = vstv %s1141
    %v1143 = vmul.f32 %v1142, %v1004
    %v1144 = vmul.f32 %v1142, %v1005
    %v1145 = vmul.f32 %v1142, %v177
    %v1146 = vmul.f32 %v1142, %v178
    %v1147 = vmul.f32 %v1142, %v1006
    %v1148 = vmul.f32 %v1142, %v1007
    %v1155 = vrot.slane %v1143, 4
    %v1156 = vrot.slane %v1145, 4
    %v1157 = vsel %vm993, %v1155, %v1156
    %v1158 = vrot.slane %v1144, 4
    %v1159 = vrot.slane %v1146, 4
    %v1160 = vsel %vm993, %v1158, %v1159
    %v1161 = vrot.slane %v1147, 4
    %v1162 = vsel %vm993, %v1156, %v1161
    %v1163 = vrot.slane %v1148, 4
    %v1164 = vsel %vm993, %v1159, %v1163
    %1165 = vrot.lane.b32.xlu0 %v1157, 124
    %v1166 = vpop.permute.xlu0 %1165
    %1167 = vrot.lane.b32.xlu0 %v1160, 124
    %v1168 = vpop.permute.xlu0 %1167
    %1169 = vrot.lane.b32.xlu0 %v1162, 124
    %v1170 = vpop.permute.xlu0 %1169
    %1171 = vrot.lane.b32.xlu0 %v1164, 124
    %v1172 = vpop.permute.xlu0 %1171
    %v1173 = vsel %vm84, %v1166, %v1168
    %v1174 = vsel %vm84, %v1170, %v1172
    %v1179 = vadd.f32 %v1035, %v1173
    %v1180 = vadd.f32 %v1036, %v1168
    %v1181 = vadd.f32 %v1037, %v1174
    %v1182 = vadd.f32 %v1038, %v1172
    %s1183 = sld [smem:[#allocation2 + $0x22]]
    %v1184 = vstv %s1183
    %v1185 = vmul.f32 %v1184, %v1004
    %v1186 = vmul.f32 %v1184, %v1005
    %v1187 = vmul.f32 %v1184, %v177
    %v1188 = vmul.f32 %v1184, %v178
    %v1189 = vmul.f32 %v1184, %v1006
    %v1190 = vmul.f32 %v1184, %v1007
    %v1197 = vrot.slane %v1185, 4
    %v1198 = vrot.slane %v1187, 4
    %v1199 = vsel %vm993, %v1197, %v1198
    %v1200 = vrot.slane %v1186, 4
    %v1201 = vrot.slane %v1188, 4
    %v1202 = vsel %vm993, %v1200, %v1201
    %v1203 = vrot.slane %v1189, 4
    %v1204 = vsel %vm993, %v1198, %v1203
    %v1205 = vrot.slane %v1190, 4
    %v1206 = vsel %vm993, %v1201, %v1205
    %1207 = vrot.lane.b32.xlu0 %v1199, 124
    %v1208 = vpop.permute.xlu0 %1207
    %1209 = vrot.lane.b32.xlu0 %v1202, 124
    %v1210 = vpop.permute.xlu0 %1209
    %1211 = vrot.lane.b32.xlu0 %v1204, 124
    %v1212 = vpop.permute.xlu0 %1211
    %1213 = vrot.lane.b32.xlu0 %v1206, 124
    %v1214 = vpop.permute.xlu0 %1213
    %v1215 = vsel %vm84, %v1208, %v1210
    %v1216 = vsel %vm84, %v1212, %v1214
    %v1221 = vadd.f32 %v1067, %v1215
    %v1222 = vadd.f32 %v1068, %v1210
    %v1223 = vadd.f32 %v1069, %v1216
    %v1224 = vadd.f32 %v1070, %v1214
    %s1225 = sld [smem:[#allocation2 + $0x23]]
    %v1226 = vld [vmem:[%s1] sm:$0xe0]
    %v1227 = vld [vmem:[%s1 + $0x20] sm:$0x1f]
    %v1228 = vstv %s1225
    %v1229 = vmul.f32 %v1228, %v1226
    %v1230 = vmul.f32 %v1228, %v149
    %v1231 = vmul.f32 %v1228, %v1227
    %vm1235 = vcmask 1042432
    %v1236 = vrot.slane %v1229, 5
    %v1237 = vrot.slane %v1230, 5
    %v1238 = vsel %vm1235, %v1236, %v1237
    %v1239 = vrot.slane %v1231, 5
    %v1240 = vsel %vm1235, %v1237, %v1239
    %1241 = vrot.lane.b32.xlu0 %v1238, 3
    %v1242 = vpop.permute.xlu0 %1241
    %1243 = vrot.lane.b32.xlu0 %v1240, 3
    %v1244 = vpop.permute.xlu0 %1243
    %v1247 = vadd.f32 %v1099, %v1242
    %v1248 = vadd.f32 %v1100, %v1242
    %v1249 = vadd.f32 %v1101, %v1244
    %v1250 = vadd.f32 %v1102, %v1244
    %s1251 = sld [smem:[#allocation2 + $0x24]]
    %v1252 = vld [vmem:[%s1] sm:$0xe0]
    %v1253 = vld [vmem:[%s1 + $0x8] sm:$0xe0]
    %v1254 = vld [vmem:[%s1 + $0x20] sm:$0x1f]
    %v1255 = vld [vmem:[%s1 + $0x28] sm:$0x1f]
    %v1256 = vstv %s1251
    %v1257 = vmul.f32 %v1256, %v1252
    %v1258 = vmul.f32 %v1256, %v1253
    %v1259 = vmul.f32 %v1256, %v177
    %v1260 = vmul.f32 %v1256, %v178
    %v1261 = vmul.f32 %v1256, %v1254
    %v1262 = vmul.f32 %v1256, %v1255
    %v1269 = vrot.slane %v1257, 5
    %v1270 = vrot.slane %v1259, 5
    %v1271 = vsel %vm1235, %v1269, %v1270
    %v1272 = vrot.slane %v1258, 5
    %v1273 = vrot.slane %v1260, 5
    %v1274 = vsel %vm1235, %v1272, %v1273
    %v1275 = vrot.slane %v1261, 5
    %v1276 = vsel %vm1235, %v1270, %v1275
    %v1277 = vrot.slane %v1262, 5
    %v1278 = vsel %vm1235, %v1273, %v1277
    %1279 = vrot.lane.b32.xlu0 %v1271, 127
    %v1280 = vpop.permute.xlu0 %1279
    %1281 = vrot.lane.b32.xlu0 %v1274, 127
    %v1282 = vpop.permute.xlu0 %1281
    %1283 = vrot.lane.b32.xlu0 %v1276, 127
    %v1284 = vpop.permute.xlu0 %1283
    %1285 = vrot.lane.b32.xlu0 %v1278, 127
    %v1286 = vpop.permute.xlu0 %1285
    %v1287 = vsel %vm212, %v1280, %v1282
    %v1288 = vsel %vm212, %v1284, %v1286
    %v1291 = vadd.f32 %v1139, %v1287
    %v1292 = vadd.f32 %v1140, %v1288
    %s1293 = sld [smem:[#allocation2 + $0x25]]
    %v1294 = vstv %s1293
    %v1295 = vmul.f32 %v1294, %v1252
    %v1296 = vmul.f32 %v1294, %v1253
    %v1297 = vmul.f32 %v1294, %v177
    %v1298 = vmul.f32 %v1294, %v178
    %v1299 = vmul.f32 %v1294, %v1254
    %v1300 = vmul.f32 %v1294, %v1255
    %v1307 = vrot.slane %v1295, 5
    %v1308 = vrot.slane %v1297, 5
    %v1309 = vsel %vm1235, %v1307, %v1308
    %v1310 = vrot.slane %v1296, 5
    %v1311 = vrot.slane %v1298, 5
    %v1312 = vsel %vm1235, %v1310, %v1311
    %v1313 = vrot.slane %v1299, 5
    %v1314 = vsel %vm1235, %v1308, %v1313
    %v1315 = vrot.slane %v1300, 5
    %v1316 = vsel %vm1235, %v1311, %v1315
    %1317 = vrot.lane.b32.xlu0 %v1309, 127
    %v1318 = vpop.permute.xlu0 %1317
    %1319 = vrot.lane.b32.xlu0 %v1312, 127
    %v1320 = vpop.permute.xlu0 %1319
    %1321 = vrot.lane.b32.xlu0 %v1314, 127
    %v1322 = vpop.permute.xlu0 %1321
    %1323 = vrot.lane.b32.xlu0 %v1316, 127
    %v1324 = vpop.permute.xlu0 %1323
    %v1325 = vsel %vm212, %v1318, %v1320
    %v1326 = vsel %vm212, %v1322, %v1324
    %v1331 = vadd.f32 %v1179, %v1325
    %v1332 = vadd.f32 %v1180, %v1320
    %v1333 = vadd.f32 %v1181, %v1326
    %v1334 = vadd.f32 %v1182, %v1324
    %s1335 = sld [smem:[#allocation2 + $0x26]]
    %v1336 = vstv %s1335
    %v1337 = vmul.f32 %v1336, %v1252
    %v1338 = vmul.f32 %v1336, %v1253
    %v1339 = vmul.f32 %v1336, %v177
    %v1340 = vmul.f32 %v1336, %v178
    %v1341 = vmul.f32 %v1336, %v1254
    %v1342 = vmul.f32 %v1336, %v1255
    %v1349 = vrot.slane %v1337, 5
    %v1350 = vrot.slane %v1339, 5
    %v1351 = vsel %vm1235, %v1349, %v1350
    %v1352 = vrot.slane %v1338, 5
    %v1353 = vrot.slane %v1340, 5
    %v1354 = vsel %vm1235, %v1352, %v1353
    %v1355 = vrot.slane %v1341, 5
    %v1356 = vsel %vm1235, %v1350, %v1355
    %v1357 = vrot.slane %v1342, 5
    %v1358 = vsel %vm1235, %v1353, %v1357
    %1359 = vrot.lane.b32.xlu0 %v1351, 127
    %v1360 = vpop.permute.xlu0 %1359
    %1361 = vrot.lane.b32.xlu0 %v1354, 127
    %v1362 = vpop.permute.xlu0 %1361
    %1363 = vrot.lane.b32.xlu0 %v1356, 127
    %v1364 = vpop.permute.xlu0 %1363
    %1365 = vrot.lane.b32.xlu0 %v1358, 127
    %v1366 = vpop.permute.xlu0 %1365
    %v1367 = vsel %vm212, %v1360, %v1362
    %v1368 = vsel %vm212, %v1364, %v1366
    %v1373 = vadd.f32 %v1221, %v1367
    %v1374 = vadd.f32 %v1222, %v1362
    %v1375 = vadd.f32 %v1223, %v1368
    %v1376 = vadd.f32 %v1224, %v1366
    %s1377 = sld [smem:[#allocation2 + $0x27]]
    %v1378 = vstv %s1377
    %v1379 = vmul.f32 %v1378, %v1252
    %v1380 = vmul.f32 %v1378, %v1253
    %v1381 = vmul.f32 %v1378, %v177
    %v1382 = vmul.f32 %v1378, %v178
    %v1383 = vmul.f32 %v1378, %v1254
    %v1384 = vmul.f32 %v1378, %v1255
    %v1391 = vrot.slane %v1379, 5
    %v1392 = vrot.slane %v1381, 5
    %v1393 = vsel %vm1235, %v1391, %v1392
    %v1394 = vrot.slane %v1380, 5
    %v1395 = vrot.slane %v1382, 5
    %v1396 = vsel %vm1235, %v1394, %v1395
    %v1397 = vrot.slane %v1383, 5
    %v1398 = vsel %vm1235, %v1392, %v1397
    %v1399 = vrot.slane %v1384, 5
    %v1400 = vsel %vm1235, %v1395, %v1399
    %1401 = vrot.lane.b32.xlu0 %v1393, 127
    %v1402 = vpop.permute.xlu0 %1401
    %1403 = vrot.lane.b32.xlu0 %v1396, 127
    %v1404 = vpop.permute.xlu0 %1403
    %1405 = vrot.lane.b32.xlu0 %v1398, 127
    %v1406 = vpop.permute.xlu0 %1405
    %1407 = vrot.lane.b32.xlu0 %v1400, 127
    %v1408 = vpop.permute.xlu0 %1407
    %v1409 = vsel %vm212, %v1402, %v1404
    %v1410 = vsel %vm212, %v1406, %v1408
    %v1415 = vadd.f32 %v1247, %v1409
    %v1416 = vadd.f32 %v1248, %v1404
    %v1417 = vadd.f32 %v1249, %v1410
    %v1418 = vadd.f32 %v1250, %v1408
    %s1419 = sld [smem:[#allocation2 + $0x28]]
    %v1420 = vstv %s1419
    %v1421 = vmul.f32 %v1420, %v1252
    %v1422 = vmul.f32 %v1420, %v1253
    %v1423 = vmul.f32 %v1420, %v177
    %v1424 = vmul.f32 %v1420, %v178
    %v1425 = vmul.f32 %v1420, %v1254
    %v1426 = vmul.f32 %v1420, %v1255
    %v1433 = vrot.slane %v1421, 5
    %v1434 = vrot.slane %v1423, 5
    %v1435 = vsel %vm1235, %v1433, %v1434
    %v1436 = vrot.slane %v1422, 5
    %v1437 = vrot.slane %v1424, 5
    %v1438 = vsel %vm1235, %v1436, %v1437
    %v1439 = vrot.slane %v1425, 5
    %v1440 = vsel %vm1235, %v1434, %v1439
    %v1441 = vrot.slane %v1426, 5
    %v1442 = vsel %vm1235, %v1437, %v1441
    %1443 = vrot.lane.b32.xlu0 %v1435, 123
    %v1444 = vpop.permute.xlu0 %1443
    %1445 = vrot.lane.b32.xlu0 %v1438, 123
    %v1446 = vpop.permute.xlu0 %1445
    %1447 = vrot.lane.b32.xlu0 %v1440, 123
    %v1448 = vpop.permute.xlu0 %1447
    %1449 = vrot.lane.b32.xlu0 %v1442, 123
    %v1450 = vpop.permute.xlu0 %1449
    %v1451 = vsel %vm377, %v1444, %v1446
    %v1452 = vsel %vm377, %v1448, %v1450
    %v1455 = vadd.f32 %v1291, %v1451
    %v1456 = vadd.f32 %v1292, %v1452
    %s1457 = sld [smem:[#allocation2 + $0x29]]
    %v1458 = vstv %s1457
    %v1459 = vmul.f32 %v1458, %v1252
    %v1460 = vmul.f32 %v1458, %v1253
    %v1461 = vmul.f32 %v1458, %v177
    %v1462 = vmul.f32 %v1458, %v178
    %v1463 = vmul.f32 %v1458, %v1254
    %v1464 = vmul.f32 %v1458, %v1255
    %v1471 = vrot.slane %v1459, 5
    %v1472 = vrot.slane %v1461, 5
    %v1473 = vsel %vm1235, %v1471, %v1472
    %v1474 = vrot.slane %v1460, 5
    %v1475 = vrot.slane %v1462, 5
    %v1476 = vsel %vm1235, %v1474, %v1475
    %v1477 = vrot.slane %v1463, 5
    %v1478 = vsel %vm1235, %v1472, %v1477
    %v1479 = vrot.slane %v1464, 5
    %v1480 = vsel %vm1235, %v1475, %v1479
    %1481 = vrot.lane.b32.xlu0 %v1473, 123
    %v1482 = vpop.permute.xlu0 %1481
    %1483 = vrot.lane.b32.xlu0 %v1476, 123
    %v1484 = vpop.permute.xlu0 %1483
    %1485 = vrot.lane.b32.xlu0 %v1478, 123
    %v1486 = vpop.permute.xlu0 %1485
    %1487 = vrot.lane.b32.xlu0 %v1480, 123
    %v1488 = vpop.permute.xlu0 %1487
    %v1489 = vsel %vm377, %v1482, %v1484
    %v1490 = vsel %vm377, %v1486, %v1488
    %v1495 = vadd.f32 %v1331, %v1489
    %v1496 = vadd.f32 %v1332, %v1484
    %v1497 = vadd.f32 %v1333, %v1490
    %v1498 = vadd.f32 %v1334, %v1488
    %s1499 = sld [smem:[#allocation2 + $0x2a]]
    %v1500 = vld [vmem:[%s1] sm:$0xc0]
    %v1501 = vld [vmem:[%s1 + $0x20] sm:$0x3f]
    %v1502 = vstv %s1499
    %v1503 = vmul.f32 %v1502, %v1500
    %v1504 = vmul.f32 %v1502, %v149
    %v1505 = vmul.f32 %v1502, %v1501
    %vm1509 = vcmask 1041408
    %v1510 = vrot.slane %v1503, 6
    %v1511 = vrot.slane %v1504, 6
    %v1512 = vsel %vm1509, %v1510, %v1511
    %v1513 = vrot.slane %v1505, 6
    %v1514 = vsel %vm1509, %v1511, %v1513
    %1515 = vrot.lane.b32.xlu0 %v1512, 2
    %v1516 = vpop.permute.xlu0 %1515
    %1517 = vrot.lane.b32.xlu0 %v1514, 2
    %v1518 = vpop.permute.xlu0 %1517
    %v1521 = vadd.f32 %v1373, %v1516
    %v1522 = vadd.f32 %v1374, %v1516
    %v1523 = vadd.f32 %v1375, %v1518
    %v1524 = vadd.f32 %v1376, %v1518
    %s1525 = sld [smem:[#allocation2 + $0x2b]]
    %v1526 = vld [vmem:[%s1] sm:$0xc0]
    %v1527 = vld [vmem:[%s1 + $0x8] sm:$0xc0]
    %v1528 = vld [vmem:[%s1 + $0x20] sm:$0x3f]
    %v1529 = vld [vmem:[%s1 + $0x28] sm:$0x3f]
    %v1530 = vstv %s1525
    %v1531 = vmul.f32 %v1530, %v1526
    %v1532 = vmul.f32 %v1530, %v1527
    %v1533 = vmul.f32 %v1530, %v177
    %v1534 = vmul.f32 %v1530, %v178
    %v1535 = vmul.f32 %v1530, %v1528
    %v1536 = vmul.f32 %v1530, %v1529
    %v1543 = vrot.slane %v1531, 6
    %v1544 = vrot.slane %v1533, 6
    %v1545 = vsel %vm1509, %v1543, %v1544
    %v1546 = vrot.slane %v1532, 6
    %v1547 = vrot.slane %v1534, 6
    %v1548 = vsel %vm1509, %v1546, %v1547
    %v1549 = vrot.slane %v1535, 6
    %v1550 = vsel %vm1509, %v1544, %v1549
    %v1551 = vrot.slane %v1536, 6
    %v1552 = vsel %vm1509, %v1547, %v1551
    %1553 = vrot.lane.b32.xlu0 %v1545, 2
    %v1554 = vpop.permute.xlu0 %1553
    %1555 = vrot.lane.b32.xlu0 %v1548, 2
    %v1556 = vpop.permute.xlu0 %1555
    %1557 = vrot.lane.b32.xlu0 %v1550, 2
    %v1558 = vpop.permute.xlu0 %1557
    %1559 = vrot.lane.b32.xlu0 %v1552, 2
    %v1560 = vpop.permute.xlu0 %1559
    %v1561 = vsel %vm488, %v1554, %v1556
    %v1562 = vsel %vm488, %v1558, %v1560
    %v1567 = vadd.f32 %v1415, %v1554
    %v1568 = vadd.f32 %v1416, %v1561
    %v1569 = vadd.f32 %v1417, %v1558
    %v1570 = vadd.f32 %v1418, %v1562
    %s1571 = sld [smem:[#allocation2 + $0x2c]]
    %v1572 = vstv %s1571
    %v1573 = vmul.f32 %v1572, %v1526
    %v1574 = vmul.f32 %v1572, %v1527
    %v1575 = vmul.f32 %v1572, %v177
    %v1576 = vmul.f32 %v1572, %v178
    %v1577 = vmul.f32 %v1572, %v1528
    %v1578 = vmul.f32 %v1572, %v1529
    %v1585 = vrot.slane %v1573, 6
    %v1586 = vrot.slane %v1575, 6
    %v1587 = vsel %vm1509, %v1585, %v1586
    %v1588 = vrot.slane %v1574, 6
    %v1589 = vrot.slane %v1576, 6
    %v1590 = vsel %vm1509, %v1588, %v1589
    %v1591 = vrot.slane %v1577, 6
    %v1592 = vsel %vm1509, %v1586, %v1591
    %v1593 = vrot.slane %v1578, 6
    %v1594 = vsel %vm1509, %v1589, %v1593
    %1595 = vrot.lane.b32.xlu0 %v1587, 126
    %v1596 = vpop.permute.xlu0 %1595
    %1597 = vrot.lane.b32.xlu0 %v1590, 126
    %v1598 = vpop.permute.xlu0 %1597
    %1599 = vrot.lane.b32.xlu0 %v1592, 126
    %v1600 = vpop.permute.xlu0 %1599
    %1601 = vrot.lane.b32.xlu0 %v1594, 126
    %v1602 = vpop.permute.xlu0 %1601
    %v1603 = vsel %vm531, %v1596, %v1598
    %v1604 = vsel %vm531, %v1600, %v1602
    %v1607 = vadd.f32 %v1455, %v1603
    %v1608 = vadd.f32 %v1456, %v1604
    %s1609 = sld [smem:[#allocation2 + $0x2d]]
    %v1610 = vstv %s1609
    %v1611 = vmul.f32 %v1610, %v1526
    %v1612 = vmul.f32 %v1610, %v1527
    %v1613 = vmul.f32 %v1610, %v177
    %v1614 = vmul.f32 %v1610, %v178
    %v1615 = vmul.f32 %v1610, %v1528
    %v1616 = vmul.f32 %v1610, %v1529
    %v1623 = vrot.slane %v1611, 6
    %v1624 = vrot.slane %v1613, 6
    %v1625 = vsel %vm1509, %v1623, %v1624
    %v1626 = vrot.slane %v1612, 6
    %v1627 = vrot.slane %v1614, 6
    %v1628 = vsel %vm1509, %v1626, %v1627
    %v1629 = vrot.slane %v1615, 6
    %v1630 = vsel %vm1509, %v1624, %v1629
    %v1631 = vrot.slane %v1616, 6
    %v1632 = vsel %vm1509, %v1627, %v1631
    %1633 = vrot.lane.b32.xlu0 %v1625, 126
    %v1634 = vpop.permute.xlu0 %1633
    %1635 = vrot.lane.b32.xlu0 %v1628, 126
    %v1636 = vpop.permute.xlu0 %1635
    %1637 = vrot.lane.b32.xlu0 %v1630, 126
    %v1638 = vpop.permute.xlu0 %1637
    %1639 = vrot.lane.b32.xlu0 %v1632, 126
    %v1640 = vpop.permute.xlu0 %1639
    %v1641 = vsel %vm531, %v1634, %v1636
    %v1642 = vsel %vm531, %v1638, %v1640
    %v1647 = vadd.f32 %v1495, %v1641
    %v1648 = vadd.f32 %v1496, %v1636
    %v1649 = vadd.f32 %v1497, %v1642
    %v1650 = vadd.f32 %v1498, %v1640
    %s1651 = sld [smem:[#allocation2 + $0x2e]]
    %v1652 = vstv %s1651
    %v1653 = vmul.f32 %v1652, %v1526
    %v1654 = vmul.f32 %v1652, %v1527
    %v1655 = vmul.f32 %v1652, %v177
    %v1656 = vmul.f32 %v1652, %v178
    %v1657 = vmul.f32 %v1652, %v1528
    %v1658 = vmul.f32 %v1652, %v1529
    %v1665 = vrot.slane %v1653, 6
    %v1666 = vrot.slane %v1655, 6
    %v1667 = vsel %vm1509, %v1665, %v1666
    %v1668 = vrot.slane %v1654, 6
    %v1669 = vrot.slane %v1656, 6
    %v1670 = vsel %vm1509, %v1668, %v1669
    %v1671 = vrot.slane %v1657, 6
    %v1672 = vsel %vm1509, %v1666, %v1671
    %v1673 = vrot.slane %v1658, 6
    %v1674 = vsel %vm1509, %v1669, %v1673
    %1675 = vrot.lane.b32.xlu0 %v1667, 126
    %v1676 = vpop.permute.xlu0 %1675
    %1677 = vrot.lane.b32.xlu0 %v1670, 126
    %v1678 = vpop.permute.xlu0 %1677
    %1679 = vrot.lane.b32.xlu0 %v1672, 126
    %v1680 = vpop.permute.xlu0 %1679
    %1681 = vrot.lane.b32.xlu0 %v1674, 126
    %v1682 = vpop.permute.xlu0 %1681
    %v1683 = vsel %vm531, %v1676, %v1678
    %v1684 = vsel %vm531, %v1680, %v1682
    %v1689 = vadd.f32 %v1521, %v1683
    %v1690 = vadd.f32 %v1522, %v1678
    %v1691 = vadd.f32 %v1523, %v1684
    %v1692 = vadd.f32 %v1524, %v1682
    %s1693 = sld [smem:[#allocation2 + $0x2f]]
    %v1694 = vstv %s1693
    %v1695 = vmul.f32 %v1694, %v1526
    %v1696 = vmul.f32 %v1694, %v1527
    %v1697 = vmul.f32 %v1694, %v177
    %v1698 = vmul.f32 %v1694, %v178
    %v1699 = vmul.f32 %v1694, %v1528
    %v1700 = vmul.f32 %v1694, %v1529
    %v1707 = vrot.slane %v1695, 6
    %v1708 = vrot.slane %v1697, 6
    %v1709 = vsel %vm1509, %v1707, %v1708
    %v1710 = vrot.slane %v1696, 6
    %v1711 = vrot.slane %v1698, 6
    %v1712 = vsel %vm1509, %v1710, %v1711
    %v1713 = vrot.slane %v1699, 6
    %v1714 = vsel %vm1509, %v1708, %v1713
    %v1715 = vrot.slane %v1700, 6
    %v1716 = vsel %vm1509, %v1711, %v1715
    %1717 = vrot.lane.b32.xlu0 %v1709, 126
    %v1718 = vpop.permute.xlu0 %1717
    %1719 = vrot.lane.b32.xlu0 %v1712, 126
    %v1720 = vpop.permute.xlu0 %1719
    %1721 = vrot.lane.b32.xlu0 %v1714, 126
    %v1722 = vpop.permute.xlu0 %1721
    %1723 = vrot.lane.b32.xlu0 %v1716, 126
    %v1724 = vpop.permute.xlu0 %1723
    %v1725 = vsel %vm531, %v1718, %v1720
    %v1726 = vsel %vm531, %v1722, %v1724
    %v1731 = vadd.f32 %v1567, %v1725
    %v1732 = vadd.f32 %v1568, %v1720
    %v1733 = vadd.f32 %v1569, %v1726
    %v1734 = vadd.f32 %v1570, %v1724
    %s1735 = sld [smem:[#allocation2 + $0x30]]
    %v1736 = vstv %s1735
    %v1737 = vmul.f32 %v1736, %v1526
    %v1738 = vmul.f32 %v1736, %v1527
    %v1739 = vmul.f32 %v1736, %v177
    %v1740 = vmul.f32 %v1736, %v178
    %v1741 = vmul.f32 %v1736, %v1528
    %v1742 = vmul.f32 %v1736, %v1529
    %v1749 = vrot.slane %v1737, 6
    %v1750 = vrot.slane %v1739, 6
    %v1751 = vsel %vm1509, %v1749, %v1750
    %v1752 = vrot.slane %v1738, 6
    %v1753 = vrot.slane %v1740, 6
    %v1754 = vsel %vm1509, %v1752, %v1753
    %v1755 = vrot.slane %v1741, 6
    %v1756 = vsel %vm1509, %v1750, %v1755
    %v1757 = vrot.slane %v1742, 6
    %v1758 = vsel %vm1509, %v1753, %v1757
    %1759 = vrot.lane.b32.xlu0 %v1751, 122
    %v1760 = vpop.permute.xlu0 %1759
    %1761 = vrot.lane.b32.xlu0 %v1754, 122
    %v1762 = vpop.permute.xlu0 %1761
    %1763 = vrot.lane.b32.xlu0 %v1756, 122
    %v1764 = vpop.permute.xlu0 %1763
    %1765 = vrot.lane.b32.xlu0 %v1758, 122
    %v1766 = vpop.permute.xlu0 %1765
    %v1767 = vsel %vm696, %v1760, %v1762
    %v1768 = vsel %vm696, %v1764, %v1766
    %v1771 = vadd.f32 %v1607, %v1767
    %v1772 = vadd.f32 %v1608, %v1768
    %1777 = vrot.lane.b32.xlu0 %v1647, 127
    %v1778 = vpop.permute.xlu0 %1777
    %1779 = vrot.lane.b32.xlu0 %v1648, 127
    %v1780 = vpop.permute.xlu0 %1779
    %1781 = vrot.lane.b32.xlu0 %v1649, 127
    %v1782 = vpop.permute.xlu0 %1781
    %1783 = vrot.lane.b32.xlu0 %v1650, 127
    %v1784 = vpop.permute.xlu0 %1783
    %v1785 = vsel %vm212, %v1778, %v1780
    %v1786 = vsel %vm212, %v1782, %v1784
    %v1789 = vadd.f32 %v1771, %v1785
    %v1790 = vadd.f32 %v1772, %v1786
    %1795 = vrot.lane.b32.xlu0 %v1731, 127
    %v1796 = vpop.permute.xlu0 %1795
    %1797 = vrot.lane.b32.xlu0 %v1732, 127
    %v1798 = vpop.permute.xlu0 %1797
    %1799 = vrot.lane.b32.xlu0 %v1733, 127
    %v1800 = vpop.permute.xlu0 %1799
    %1801 = vrot.lane.b32.xlu0 %v1734, 127
    %v1802 = vpop.permute.xlu0 %1801
    %v1803 = vsel %vm212, %v1796, %v1798
    %v1804 = vsel %vm212, %v1800, %v1802
    %v1809 = vadd.f32 %v1689, %v1803
    %v1810 = vadd.f32 %v1690, %v1798
    %v1811 = vadd.f32 %v1691, %v1804
    %v1812 = vadd.f32 %v1692, %v1802
    %1817 = vrot.lane.b32.xlu0 %v1809, 126
    %v1818 = vpop.permute.xlu0 %1817
    %1819 = vrot.lane.b32.xlu0 %v1810, 126
    %v1820 = vpop.permute.xlu0 %1819
    %1821 = vrot.lane.b32.xlu0 %v1811, 126
    %v1822 = vpop.permute.xlu0 %1821
    %1823 = vrot.lane.b32.xlu0 %v1812, 126
    %v1824 = vpop.permute.xlu0 %1823
    %v1825 = vsel %vm531, %v1818, %v1820
    %v1826 = vsel %vm531, %v1822, %v1824
    %v1829 = vadd.f32 %v1789, %v1825
    %v1830 = vadd.f32 %v1790, %v1826
    %v1831 = vmax.f32 %v1829, 0.0
    %v1832 = vmax.f32 %v1830, 0.0
    %1833 = vst [vmem:[%s2] sm:$0xff] %v1831
    %1834 = vst [vmem:[%s2 + $0x8] sm:$0xff] %v1832
    // Predicated region
    $region14: #{simple_cnn_forward.1} parent=1 // pred_check
      _
    $region15: #{simple_cnn_forward.1} parent=1 // pred_check_branch
      %1836 = sbr.rel (0) target = $region17
    $region16: #{simple_cnn_forward.1} parent=1 // pred_region
      _
    $region17: #{simple_cnn_forward.1} parent=1 // pred_fallthru
      _
    // Predicated region
    $region18: #{simple_cnn_forward.1} parent=1 // pred_check
      _
    $region19: #{simple_cnn_forward.1} parent=1 // pred_check_branch
      %1838 = sbr.rel (0) target = $region21
    $region20: #{simple_cnn_forward.1} parent=1 // pred_region
      _
    $region21: #{simple_cnn_forward.1} parent=1 // pred_fallthru
      _
    %1839 = vsyncpa [#allocation3], 1

</llo_original>
